<compile_context>
chip_gen: v7x
topology: tpu7x:2x2x1
jax: 0.10.0
libtpu: 0.0.40
codegen_flags: <defaults>
</compile_context>

<pallas_src>
import functools

import jax
import jax.numpy as jnp
from jax import lax
from jax.experimental import pallas as pl
from jax.experimental.pallas import tpu as pltpu


# ----------------------------- math helpers -----------------------------

def _layernorm(x, gamma, beta, eps=1e-5):
    mu = jnp.mean(x, axis=-1, keepdims=True)
    var = jnp.mean((x - mu) ** 2, axis=-1, keepdims=True)
    return (x - mu) * lax.rsqrt(var + eps) * gamma + beta


def _gelu_tanh(x):
    # tanh approximation of nn.GELU (|delta| vs exact erf form <~1e-3,
    # below bf16 matmul noise); tanh runs on the EUP.
    c = 0.7978845608028654  # sqrt(2/pi)
    return 0.5 * x * (1.0 + jnp.tanh(c * (x + 0.044715 * x * x * x)))


# ------------------------------- the kernel -------------------------------

def transformer_layer_kernel(
    xq_ref, xkv_ref,
    ln1g_ref, ln1b_ref,
    wq_ref, bq_ref, wk_ref, bk_ref, wv_ref, bv_ref, wo_ref, bo_ref,
    ln2g_ref, ln2b_ref,
    w1_ref, b1_ref, w2_ref, b2_ref,
    out_ref,
    *, num_heads, att_dim,
):
    f32 = jnp.float32
    bf16 = jnp.bfloat16

    x_q = xq_ref[0]    # (TQ, D)  query tile of this grid step (f32)
    x_kv = xkv_ref[0]  # (S,  D)  full sequence for K/V (f32)

    g1 = ln1g_ref[...]
    b1n = ln1b_ref[...]
    xn_q = _layernorm(x_q, g1, b1n)     # f32
    xn_kv = _layernorm(x_kv, g1, b1n)   # f32
    xn_q_b = xn_q.astype(bf16)
    xn_kv_b = xn_kv.astype(bf16)

    tq, d = x_q.shape
    scale = att_dim ** -0.5

    att = jnp.zeros((tq, d), f32)
    # Static unrolled loop over heads (small head count). Per-head weight
    # slabs avoid any lane-slicing / concat of activations.
    for h in range(num_heads):
        q = jnp.dot(xn_q_b, wq_ref[h], preferred_element_type=f32) + bq_ref[h]   # (TQ, A)
        k = jnp.dot(xn_kv_b, wk_ref[h], preferred_element_type=f32) + bk_ref[h]  # (S,  A)
        v = jnp.dot(xn_kv_b, wv_ref[h], preferred_element_type=f32) + bv_ref[h]  # (S, Od)

        s = jnp.einsum("qa,ka->qk", (q * scale).astype(bf16), k.astype(bf16),
                       preferred_element_type=f32)                               # (TQ, S)
        s = jax.nn.sigmoid(s)
        # NOTE: `- att_bias` dropped — softmax is shift-invariant (no-op).
        s = s - jnp.max(s, axis=-1, keepdims=True)
        p = jnp.exp(s)
        p = p * pl.reciprocal(jnp.sum(p, axis=-1, keepdims=True), approx=True)

        ho = jnp.dot(p.astype(bf16), v.astype(bf16), preferred_element_type=f32)  # (TQ, Od)
        att = att + jnp.dot(ho.astype(bf16), wo_ref[h], preferred_element_type=f32)

    att = att + bo_ref[...]
    x2 = x_q + att                      # residual (dropout = identity)

    xn2 = _layernorm(x2, ln2g_ref[...], ln2b_ref[...])
    hid = jnp.dot(xn2.astype(bf16), w1_ref[...], preferred_element_type=f32) + b1_ref[...]
    hid = _gelu_tanh(hid)
    ffn = jnp.dot(hid.astype(bf16), w2_ref[...], preferred_element_type=f32) + b2_ref[...]

    out_ref[0] = x2 + ffn


# ------------------------------- the wrapper -------------------------------

def _pick_q_tile(S):
    if S % 8 != 0:
        return S
    for t in (128, 64, 32, 16, 8):
        if S % t == 0:
            return t
    return S


def transformer_layer(x, params, *, num_heads, att_dim, out_dim, att_bias=0.5,
                      q_tile=None):
    del att_bias  # shift-invariant under softmax; kernel drops it.
    B, S, D = x.shape
    assert out_dim == D, "residual add requires out_dim == in_dim"
    H, A, Od = num_heads, att_dim, out_dim

    if q_tile is None:
        q_tile = _pick_q_tile(S)
    assert S % q_tile == 0 and (q_tile == S or q_tile % 8 == 0)

    bf16 = jnp.bfloat16
    # Per-head weight slabs (prepared once, outside the kernel). Weights in
    # bf16 (MXU operands, half the DMA/VMEM); biases / LN params stay f32.
    wq3 = params["wq"].reshape(D, H, A).transpose(1, 0, 2).astype(bf16)   # (H, D, A)
    wk3 = params["wk"].reshape(D, H, A).transpose(1, 0, 2).astype(bf16)   # (H, D, A)
    wv3 = params["wv"].reshape(D, H, Od).transpose(1, 0, 2).astype(bf16)  # (H, D, Od)
    wo3 = params["wo"].reshape(H, Od, D).astype(bf16)                     # (H, Od, D)
    bq3 = params["bq"].reshape(H, 1, A)
    bk3 = params["bk"].reshape(H, 1, A)
    bv3 = params["bv"].reshape(H, 1, Od)
    w1 = params["w1"].astype(bf16)
    w2 = params["w2"].astype(bf16)

    weights = [
        params["ln1_g"], params["ln1_b"],
        wq3, bq3, wk3, bk3, wv3, bv3, wo3, params["bo"],
        params["ln2_g"], params["ln2_b"],
        w1, params["b1"], w2, params["b2"],
    ]

    def full_spec(arr):  # replicated, grid-invariant block (Pallas skips re-DMA)
        n = arr.ndim
        return pl.BlockSpec(arr.shape, lambda b, qi, n=n: (0,) * n)

    in_specs = (
        [pl.BlockSpec((1, q_tile, D), lambda b, qi: (b, qi, 0)),   # query tile
         pl.BlockSpec((1, S, D), lambda b, qi: (b, 0, 0))]         # full seq for K/V
        + [full_spec(w) for w in weights]
    )

    kern = functools.partial(transformer_layer_kernel,
                             num_heads=num_heads, att_dim=att_dim)

    return pl.pallas_call(
        kern,
        out_shape=jax.ShapeDtypeStruct((B, S, D), jnp.float32),
        grid_spec=pltpu.PrefetchScalarGridSpec(
            num_scalar_prefetch=0,
            grid=(B, S // q_tile),
            in_specs=in_specs,
            out_specs=pl.BlockSpec((1, q_tile, D), lambda b, qi: (b, qi, 0)),
        ),
        compiler_params=pltpu.CompilerParams(
            dimension_semantics=("parallel", "parallel"),
            vmem_limit_bytes=32 * 1024 * 1024,
        ),
    )(x, x, *weights)


# ----------------------------- params & references -----------------------------

def init_params(key, in_dim, att_dim, out_dim, num_heads, ffn_hid_dim):
    """PyTorch-Linear-style deterministic init: U(-1/sqrt(fan_in), 1/sqrt(fan_in))."""
    keys = jax.random.split(key, 12)

    def lin(kw, kb, fan_in, fan_out):
        bound = 1.0 / (fan_in ** 0.5)
        w = jax.random.uniform(kw, (fan_in, fan_out), jnp.float32, -bound, bound)
        b = jax.random.uniform(kb, (1, fan_out), jnp.float32, -bound, bound)
        return w, b

    wq, bq = lin(keys[0], keys[1], in_dim, num_heads * att_dim)
    wk, bk = lin(keys[2], keys[3], in_dim, num_heads * att_dim)
    wv, bv = lin(keys[4], keys[5], in_dim, num_heads * out_dim)
    wo, bo = lin(keys[6], keys[7], num_heads * out_dim, out_dim)
    w1, b1 = lin(keys[8], keys[9], in_dim, ffn_hid_dim)
    w2, b2 = lin(keys[10], keys[11], ffn_hid_dim, in_dim)

    return dict(
        ln1_g=jnp.ones((1, in_dim), jnp.float32), ln1_b=jnp.zeros((1, in_dim), jnp.float32),
        wq=wq, bq=bq, wk=wk, bk=bk, wv=wv, bv=bv, wo=wo, bo=bo,
        ln2_g=jnp.ones((1, in_dim), jnp.float32), ln2_b=jnp.zeros((1, in_dim), jnp.float32),
        w1=w1, b1=b1, w2=w2, b2=b2,
    )


def _ln_ref(v, g, b, eps=1e-5):
    mu = jnp.mean(v, axis=-1, keepdims=True)
    var = jnp.mean((v - mu) ** 2, axis=-1, keepdims=True)
    return (v - mu) * lax.rsqrt(var + eps) * g + b


def reference_forward(x, prm, *, num_heads, att_dim, out_dim, att_bias=0.5):
    """Pure-JAX f32 replica of the PyTorch forward (eval mode, exact GELU)."""
    B, S, D = x.shape
    xn = _ln_ref(x, prm["ln1_g"], prm["ln1_b"])
    q = (xn @ prm["wq"] + prm["bq"]).reshape(B, S, num_heads, att_dim).transpose(0, 2, 1, 3)
    k = (xn @ prm["wk"] + prm["bk"]).reshape(B, S, num_heads, att_dim).transpose(0, 2, 1, 3)
    v = (xn @ prm["wv"] + prm["bv"]).reshape(B, S, num_heads, out_dim).transpose(0, 2, 1, 3)

    s = jnp.einsum("bhqa,bhka->bhqk", q * att_dim ** -0.5, k)
    s = jax.nn.sigmoid(s) - att_bias
    s = jax.nn.softmax(s, axis=-1)

    o = jnp.einsum("bhqk,bhkd->bhqd", s, v).transpose(0, 2, 1, 3).reshape(B, S, num_heads * out_dim)
    att = o @ prm["wo"] + prm["bo"]

    x2 = x + att
    xn2 = _ln_ref(x2, prm["ln2_g"], prm["ln2_b"])
    hid = jax.nn.gelu(xn2 @ prm["w1"] + prm["b1"], approximate=False)
    ffn = hid @ prm["w2"] + prm["b2"]
    return x2 + ffn


def reference_structural(x, prm, *, num_heads, att_dim, out_dim):
    """Mirrors the kernel's precision scheme (bf16 MXU operands, f32 accum,
    tanh GELU) in plain XLA — used for a tight structural correctness check."""
    f32, bf16 = jnp.float32, jnp.bfloat16
    B, S, D = x.shape
    H, A, Od = num_heads, att_dim, out_dim

    xn = _ln_ref(x, prm["ln1_g"], prm["ln1_b"])
    xb = xn.astype(bf16)
    q = jnp.einsum("bsd,df->bsf", xb, prm["wq"].astype(bf16), preferred_element_type=f32) + prm["bq"]
    k = jnp.einsum("bsd,df->bsf", xb, prm["wk"].astype(bf16), preferred_element_type=f32) + prm["bk"]
    v = jnp.einsum("bsd,df->bsf", xb, prm["wv"].astype(bf16), preferred_element_type=f32) + prm["bv"]
    q = q.reshape(B, S, H, A).transpose(0, 2, 1, 3)
    k = k.reshape(B, S, H, A).transpose(0, 2, 1, 3)
    v = v.reshape(B, S, H, Od).transpose(0, 2, 1, 3)

    s = jnp.einsum("bhqa,bhka->bhqk", (q * A ** -0.5).astype(bf16), k.astype(bf16),
                   preferred_element_type=f32)
    s = jax.nn.sigmoid(s)
    attw = jax.nn.softmax(s, axis=-1)

    ho = jnp.einsum("bhqk,bhko->bhqo", attw.astype(bf16), v.astype(bf16),
                    preferred_element_type=f32)
    ho = ho.transpose(0, 2, 1, 3).reshape(B, S, H * Od)
    att = jnp.einsum("bsf,fd->bsd", ho.astype(bf16), prm["wo"].astype(bf16),
                     preferred_element_type=f32) + prm["bo"]

    x2 = x + att
    xn2 = _ln_ref(x2, prm["ln2_g"], prm["ln2_b"])
    hid = jnp.einsum("bsd,df->bsf", xn2.astype(bf16), prm["w1"].astype(bf16),
                     preferred_element_type=f32) + prm["b1"]
    hid = _gelu_tanh(hid)
    ffn = jnp.einsum("bsf,fd->bsd", hid.astype(bf16), prm["w2"].astype(bf16),
                     preferred_element_type=f32) + prm["b2"]
    return x2 + ffn


# ----------------------------------- main -----------------------------------

if __name__ == "__main__":
    # Lane-dense demo config: feature dims are multiples of 128.
    B, S = 2, 16
    in_dim, att_dim, out_dim = 128, 128, 128   # out_dim == in_dim (residual)
    num_heads, ffn_hid_dim = 2, 256
    att_bias = 0.5
    q_tile = 8                                  # grid = (B, S // q_tile) = (2, 2)

    key = jax.random.PRNGKey(0)
    kx, kp = jax.random.split(key)
    x = jax.random.normal(kx, (B, S, in_dim), jnp.float32)
    params = init_params(kp, in_dim, att_dim, out_dim, num_heads, ffn_hid_dim)

    out = transformer_layer(x, params, num_heads=num_heads, att_dim=att_dim,
                            out_dim=out_dim, att_bias=att_bias, q_tile=q_tile)
    out = jax.block_until_ready(out)
    assert out.shape == (B, S, in_dim)

    # Tight check vs a reference that uses the same bf16-MXU/f32-accum scheme.
    ref_bf16 = reference_structural(x, params, num_heads=num_heads,
                                    att_dim=att_dim, out_dim=out_dim)
    assert jnp.allclose(out, ref_bf16, atol=1e-2, rtol=1e-2), \
        "mismatch vs bf16 structural reference"

    # Loose check vs the full-f32 PyTorch-faithful reference (bf16 precision).
    ref_f32 = reference_forward(x, params, num_heads=num_heads, att_dim=att_dim,
                                out_dim=out_dim, att_bias=att_bias)
    rel = jnp.linalg.norm(out - ref_f32) / jnp.linalg.norm(ref_f32)
    assert float(rel) < 2e-2, f"relative error vs f32 reference too large: {float(rel)}"

    print("KERNEL_OK")
</pallas_src>

<mosaic_0001>
module attributes {stable_mosaic.version = 11 : i64} {
  func.func @transformer_layer_kernel(%arg0: i32, %arg1: i32, %arg2: memref<1x8x128xf32, #tpu.memory_space<vmem>>, %arg3: memref<1x16x128xf32, #tpu.memory_space<vmem>>, %arg4: memref<1x128xf32, #tpu.memory_space<vmem>>, %arg5: memref<1x128xf32, #tpu.memory_space<vmem>>, %arg6: memref<2x128x128xbf16, #tpu.memory_space<vmem>>, %arg7: memref<2x1x128xf32, #tpu.memory_space<vmem>>, %arg8: memref<2x128x128xbf16, #tpu.memory_space<vmem>>, %arg9: memref<2x1x128xf32, #tpu.memory_space<vmem>>, %arg10: memref<2x128x128xbf16, #tpu.memory_space<vmem>>, %arg11: memref<2x1x128xf32, #tpu.memory_space<vmem>>, %arg12: memref<2x128x128xbf16, #tpu.memory_space<vmem>>, %arg13: memref<1x128xf32, #tpu.memory_space<vmem>>, %arg14: memref<1x128xf32, #tpu.memory_space<vmem>>, %arg15: memref<1x128xf32, #tpu.memory_space<vmem>>, %arg16: memref<128x256xbf16, #tpu.memory_space<vmem>>, %arg17: memref<1x256xf32, #tpu.memory_space<vmem>>, %arg18: memref<256x128xbf16, #tpu.memory_space<vmem>>, %arg19: memref<1x128xf32, #tpu.memory_space<vmem>>, %arg20: memref<1x8x128xf32, #tpu.memory_space<vmem>>) attributes {dimension_semantics = [#tpu.dimension_semantics<parallel>, #tpu.dimension_semantics<parallel>], iteration_bounds = array<i64: 2, 2>, scalar_prefetch = 0 : i64, scratch_operands = 0 : i64, tpu.core_type = #tpu.core_type<tc>, window_params = [{transform_indices = @transform_0, window_bounds = array<i64: 1, 8, 128>}, {transform_indices = @transform_1, window_bounds = array<i64: 1, 16, 128>}, {pipeline_mode = #tpu.pipeline_mode<synchronous>, transform_indices = @transform_2, window_bounds = array<i64: 1, 128>}, {pipeline_mode = #tpu.pipeline_mode<synchronous>, transform_indices = @transform_3, window_bounds = array<i64: 1, 128>}, {pipeline_mode = #tpu.pipeline_mode<synchronous>, transform_indices = @transform_4, window_bounds = array<i64: 2, 128, 128>}, {pipeline_mode = #tpu.pipeline_mode<synchronous>, transform_indices = @transform_5, window_bounds = array<i64: 2, 1, 128>}, {pipeline_mode = #tpu.pipeline_mode<synchronous>, transform_indices = @transform_6, window_bounds = array<i64: 2, 128, 128>}, {pipeline_mode = #tpu.pipeline_mode<synchronous>, transform_indices = @transform_7, window_bounds = array<i64: 2, 1, 128>}, {pipeline_mode = #tpu.pipeline_mode<synchronous>, transform_indices = @transform_8, window_bounds = array<i64: 2, 128, 128>}, {pipeline_mode = #tpu.pipeline_mode<synchronous>, transform_indices = @transform_9, window_bounds = array<i64: 2, 1, 128>}, {pipeline_mode = #tpu.pipeline_mode<synchronous>, transform_indices = @transform_10, window_bounds = array<i64: 2, 128, 128>}, {pipeline_mode = #tpu.pipeline_mode<synchronous>, transform_indices = @transform_11, window_bounds = array<i64: 1, 128>}, {pipeline_mode = #tpu.pipeline_mode<synchronous>, transform_indices = @transform_12, window_bounds = array<i64: 1, 128>}, {pipeline_mode = #tpu.pipeline_mode<synchronous>, transform_indices = @transform_13, window_bounds = array<i64: 1, 128>}, {pipeline_mode = #tpu.pipeline_mode<synchronous>, transform_indices = @transform_14, window_bounds = array<i64: 128, 256>}, {pipeline_mode = #tpu.pipeline_mode<synchronous>, transform_indices = @transform_15, window_bounds = array<i64: 1, 256>}, {pipeline_mode = #tpu.pipeline_mode<synchronous>, transform_indices = @transform_16, window_bounds = array<i64: 256, 128>}, {pipeline_mode = #tpu.pipeline_mode<synchronous>, transform_indices = @transform_17, window_bounds = array<i64: 1, 128>}, {transform_indices = @transform_18, window_bounds = array<i64: 1, 8, 128>}]} {
    %c0 = arith.constant 0 : index
    %c0_0 = arith.constant 0 : index
    %c0_1 = arith.constant 0 : index
    %0 = vector.load %arg2[%c0, %c0_0, %c0_1] : memref<1x8x128xf32, #tpu.memory_space<vmem>>, vector<1x8x128xf32>
    %1 = vector.shape_cast %0 : vector<1x8x128xf32> to vector<8x128xf32>
    %c0_2 = arith.constant 0 : index
    %c0_3 = arith.constant 0 : index
    %c0_4 = arith.constant 0 : index
    %2 = vector.load %arg3[%c0_2, %c0_3, %c0_4] : memref<1x16x128xf32, #tpu.memory_space<vmem>>, vector<1x16x128xf32>
    %3 = vector.shape_cast %2 : vector<1x16x128xf32> to vector<16x128xf32>
    %c0_5 = arith.constant 0 : index
    %c0_6 = arith.constant 0 : index
    %4 = vector.load %arg4[%c0_5, %c0_6] : memref<1x128xf32, #tpu.memory_space<vmem>>, vector<1x128xf32>
    %c0_7 = arith.constant 0 : index
    %c0_8 = arith.constant 0 : index
    %5 = vector.load %arg5[%c0_7, %c0_8] : memref<1x128xf32, #tpu.memory_space<vmem>>, vector<1x128xf32>
    %cst = arith.constant dense<0.000000e+00> : vector<8xf32>
    %6 = vector.multi_reduction <add>, %1, %cst [1] : vector<8x128xf32> to vector<8xf32>
    %7 = vector.shape_cast %6 : vector<8xf32> to vector<8x1xf32>
    %cst_9 = arith.constant 1.280000e+02 : f32
    %8 = vector.broadcast %cst_9 : f32 to vector<8x1xf32>
    %9 = arith.divf %7, %8 : vector<8x1xf32>
    %10 = vector.broadcast %9 : vector<8x1xf32> to vector<8x128xf32>
    %11 = arith.subf %1, %10 : vector<8x128xf32>
    %12 = arith.mulf %11, %11 : vector<8x128xf32>
    %cst_10 = arith.constant dense<0.000000e+00> : vector<8xf32>
    %13 = vector.multi_reduction <add>, %12, %cst_10 [1] : vector<8x128xf32> to vector<8xf32>
    %14 = vector.shape_cast %13 : vector<8xf32> to vector<8x1xf32>
    %cst_11 = arith.constant 1.280000e+02 : f32
    %15 = vector.broadcast %cst_11 : f32 to vector<8x1xf32>
    %16 = arith.divf %14, %15 : vector<8x1xf32>
    %17 = vector.broadcast %9 : vector<8x1xf32> to vector<8x128xf32>
    %18 = arith.subf %1, %17 : vector<8x128xf32>
    %cst_12 = arith.constant 9.99999974E-6 : f32
    %19 = vector.broadcast %cst_12 : f32 to vector<8x1xf32>
    %20 = arith.addf %16, %19 : vector<8x1xf32>
    %21 = math.rsqrt %20 : vector<8x1xf32>
    %22 = vector.broadcast %21 : vector<8x1xf32> to vector<8x128xf32>
    %23 = arith.mulf %18, %22 : vector<8x128xf32>
    %24 = vector.broadcast %4 : vector<1x128xf32> to vector<8x128xf32>
    %25 = arith.mulf %23, %24 : vector<8x128xf32>
    %26 = vector.broadcast %5 : vector<1x128xf32> to vector<8x128xf32>
    %27 = arith.addf %25, %26 : vector<8x128xf32>
    %cst_13 = arith.constant dense<0.000000e+00> : vector<16xf32>
    %28 = vector.multi_reduction <add>, %3, %cst_13 [1] : vector<16x128xf32> to vector<16xf32>
    %29 = vector.shape_cast %28 : vector<16xf32> to vector<16x1xf32>
    %cst_14 = arith.constant 1.280000e+02 : f32
    %30 = vector.broadcast %cst_14 : f32 to vector<16x1xf32>
    %31 = arith.divf %29, %30 : vector<16x1xf32>
    %32 = vector.broadcast %31 : vector<16x1xf32> to vector<16x128xf32>
    %33 = arith.subf %3, %32 : vector<16x128xf32>
    %34 = arith.mulf %33, %33 : vector<16x128xf32>
    %cst_15 = arith.constant dense<0.000000e+00> : vector<16xf32>
    %35 = vector.multi_reduction <add>, %34, %cst_15 [1] : vector<16x128xf32> to vector<16xf32>
    %36 = vector.shape_cast %35 : vector<16xf32> to vector<16x1xf32>
    %cst_16 = arith.constant 1.280000e+02 : f32
    %37 = vector.broadcast %cst_16 : f32 to vector<16x1xf32>
    %38 = arith.divf %36, %37 : vector<16x1xf32>
    %39 = vector.broadcast %31 : vector<16x1xf32> to vector<16x128xf32>
    %40 = arith.subf %3, %39 : vector<16x128xf32>
    %cst_17 = arith.constant 9.99999974E-6 : f32
    %41 = vector.broadcast %cst_17 : f32 to vector<16x1xf32>
    %42 = arith.addf %38, %41 : vector<16x1xf32>
    %43 = math.rsqrt %42 : vector<16x1xf32>
    %44 = vector.broadcast %43 : vector<16x1xf32> to vector<16x128xf32>
    %45 = arith.mulf %40, %44 : vector<16x128xf32>
    %46 = vector.broadcast %4 : vector<1x128xf32> to vector<16x128xf32>
    %47 = arith.mulf %45, %46 : vector<16x128xf32>
    %48 = vector.broadcast %5 : vector<1x128xf32> to vector<16x128xf32>
    %49 = arith.addf %47, %48 : vector<16x128xf32>
    %50 = arith.truncf %27 : vector<8x128xf32> to vector<8x128xbf16>
    %51 = arith.truncf %49 : vector<16x128xf32> to vector<16x128xbf16>
    %cst_18 = arith.constant 0.000000e+00 : f32
    %52 = vector.broadcast %cst_18 : f32 to vector<8x128xf32>
    %c0_19 = arith.constant 0 : index
    %c0_20 = arith.constant 0 : index
    %c0_21 = arith.constant 0 : index
    %53 = vector.load %arg6[%c0_19, %c0_20, %c0_21] : memref<2x128x128xbf16, #tpu.memory_space<vmem>>, vector<1x128x128xbf16>
    %54 = vector.shape_cast %53 : vector<1x128x128xbf16> to vector<128x128xbf16>
    %cst_22 = arith.constant dense<0.000000e+00> : vector<8x128xf32>
    %55 = tpu.matmul %50, %54, %cst_22 {dimension_numbers = #tpu.dot_dimension_numbers<[1], [0], [0], [1], [0, 0, 1, 1], [], []>} : vector<8x128xbf16>, vector<128x128xbf16>, vector<8x128xf32> -> vector<8x128xf32>
    %c0_23 = arith.constant 0 : index
    %c0_24 = arith.constant 0 : index
    %c0_25 = arith.constant 0 : index
    %56 = vector.load %arg7[%c0_23, %c0_24, %c0_25] : memref<2x1x128xf32, #tpu.memory_space<vmem>>, vector<1x1x128xf32>
    %57 = vector.shape_cast %56 : vector<1x1x128xf32> to vector<1x128xf32>
    %58 = vector.broadcast %57 : vector<1x128xf32> to vector<8x128xf32>
    %59 = arith.addf %55, %58 : vector<8x128xf32>
    %c0_26 = arith.constant 0 : index
    %c0_27 = arith.constant 0 : index
    %c0_28 = arith.constant 0 : index
    %60 = vector.load %arg8[%c0_26, %c0_27, %c0_28] : memref<2x128x128xbf16, #tpu.memory_space<vmem>>, vector<1x128x128xbf16>
    %61 = vector.shape_cast %60 : vector<1x128x128xbf16> to vector<128x128xbf16>
    %cst_29 = arith.constant dense<0.000000e+00> : vector<16x128xf32>
    %62 = tpu.matmul %51, %61, %cst_29 {dimension_numbers = #tpu.dot_dimension_numbers<[1], [0], [0], [1], [0, 0, 1, 1], [], []>} : vector<16x128xbf16>, vector<128x128xbf16>, vector<16x128xf32> -> vector<16x128xf32>
    %c0_30 = arith.constant 0 : index
    %c0_31 = arith.constant 0 : index
    %c0_32 = arith.constant 0 : index
    %63 = vector.load %arg9[%c0_30, %c0_31, %c0_32] : memref<2x1x128xf32, #tpu.memory_space<vmem>>, vector<1x1x128xf32>
    %64 = vector.shape_cast %63 : vector<1x1x128xf32> to vector<1x128xf32>
    %65 = vector.broadcast %64 : vector<1x128xf32> to vector<16x128xf32>
    %66 = arith.addf %62, %65 : vector<16x128xf32>
    %c0_33 = arith.constant 0 : index
    %c0_34 = arith.constant 0 : index
    %c0_35 = arith.constant 0 : index
    %67 = vector.load %arg10[%c0_33, %c0_34, %c0_35] : memref<2x128x128xbf16, #tpu.memory_space<vmem>>, vector<1x128x128xbf16>
    %68 = vector.shape_cast %67 : vector<1x128x128xbf16> to vector<128x128xbf16>
    %cst_36 = arith.constant dense<0.000000e+00> : vector<16x128xf32>
    %69 = tpu.matmul %51, %68, %cst_36 {dimension_numbers = #tpu.dot_dimension_numbers<[1], [0], [0], [1], [0, 0, 1, 1], [], []>} : vector<16x128xbf16>, vector<128x128xbf16>, vector<16x128xf32> -> vector<16x128xf32>
    %c0_37 = arith.constant 0 : index
    %c0_38 = arith.constant 0 : index
    %c0_39 = arith.constant 0 : index
    %70 = vector.load %arg11[%c0_37, %c0_38, %c0_39] : memref<2x1x128xf32, #tpu.memory_space<vmem>>, vector<1x1x128xf32>
    %71 = vector.shape_cast %70 : vector<1x1x128xf32> to vector<1x128xf32>
    %72 = vector.broadcast %71 : vector<1x128xf32> to vector<16x128xf32>
    %73 = arith.addf %69, %72 : vector<16x128xf32>
    %cst_40 = arith.constant 0.0883883461 : f32
    %74 = vector.broadcast %cst_40 : f32 to vector<8x128xf32>
    %75 = arith.mulf %59, %74 : vector<8x128xf32>
    %76 = arith.truncf %75 : vector<8x128xf32> to vector<8x128xbf16>
    %77 = arith.truncf %66 : vector<16x128xf32> to vector<16x128xbf16>
    "tpu.trace_start"() <{level = 10 : i32, message = "qa,ka->qk"}> : () -> ()
    %cst_41 = arith.constant dense<0.000000e+00> : vector<8x16xf32>
    %78 = tpu.matmul %76, %77, %cst_41 {dimension_numbers = #tpu.dot_dimension_numbers<[1], [1], [0], [0], [0, 0, 1, 0], [], []>} : vector<8x128xbf16>, vector<16x128xbf16>, vector<8x16xf32> -> vector<8x16xf32>
    "tpu.trace_stop"() : () -> ()
    %79 = arith.negf %78 : vector<8x16xf32>
    %80 = math.exp %79 : vector<8x16xf32>
    %cst_42 = arith.constant 1.000000e+00 : f32
    %81 = vector.broadcast %cst_42 : f32 to vector<8x16xf32>
    %82 = arith.addf %81, %80 : vector<8x16xf32>
    %83 = arith.divf %81, %82 : vector<8x16xf32>
    %cst_43 = arith.constant dense<0xFF800000> : vector<8xf32>
    %84 = vector.multi_reduction <maximumf>, %83, %cst_43 [1] : vector<8x16xf32> to vector<8xf32>
    %85 = vector.shape_cast %84 : vector<8xf32> to vector<8x1xf32>
    %86 = vector.broadcast %85 : vector<8x1xf32> to vector<8x16xf32>
    %87 = arith.subf %83, %86 : vector<8x16xf32>
    %88 = math.exp %87 : vector<8x16xf32>
    %cst_44 = arith.constant dense<0.000000e+00> : vector<8xf32>
    %89 = vector.multi_reduction <add>, %88, %cst_44 [1] : vector<8x16xf32> to vector<8xf32>
    %90 = vector.shape_cast %89 : vector<8xf32> to vector<8x1xf32>
    %91 = tpu.reciprocal %90 {approx = true} : vector<8x1xf32> -> vector<8x1xf32>
    %92 = vector.broadcast %91 : vector<8x1xf32> to vector<8x16xf32>
    %93 = arith.mulf %88, %92 : vector<8x16xf32>
    %94 = arith.truncf %93 : vector<8x16xf32> to vector<8x16xbf16>
    %95 = arith.truncf %73 : vector<16x128xf32> to vector<16x128xbf16>
    %cst_45 = arith.constant dense<0.000000e+00> : vector<8x128xf32>
    %96 = tpu.matmul %94, %95, %cst_45 {dimension_numbers = #tpu.dot_dimension_numbers<[1], [0], [0], [1], [0, 0, 1, 1], [], []>} : vector<8x16xbf16>, vector<16x128xbf16>, vector<8x128xf32> -> vector<8x128xf32>
    %97 = arith.truncf %96 : vector<8x128xf32> to vector<8x128xbf16>
    %c0_46 = arith.constant 0 : index
    %c0_47 = arith.constant 0 : index
    %c0_48 = arith.constant 0 : index
    %98 = vector.load %arg12[%c0_46, %c0_47, %c0_48] : memref<2x128x128xbf16, #tpu.memory_space<vmem>>, vector<1x128x128xbf16>
    %99 = vector.shape_cast %98 : vector<1x128x128xbf16> to vector<128x128xbf16>
    %cst_49 = arith.constant dense<0.000000e+00> : vector<8x128xf32>
    %100 = tpu.matmul %97, %99, %cst_49 {dimension_numbers = #tpu.dot_dimension_numbers<[1], [0], [0], [1], [0, 0, 1, 1], [], []>} : vector<8x128xbf16>, vector<128x128xbf16>, vector<8x128xf32> -> vector<8x128xf32>
    %101 = arith.addf %52, %100 : vector<8x128xf32>
    %c1 = arith.constant 1 : index
    %c0_50 = arith.constant 0 : index
    %c0_51 = arith.constant 0 : index
    %102 = vector.load %arg6[%c1, %c0_50, %c0_51] : memref<2x128x128xbf16, #tpu.memory_space<vmem>>, vector<1x128x128xbf16>
    %103 = vector.shape_cast %102 : vector<1x128x128xbf16> to vector<128x128xbf16>
    %cst_52 = arith.constant dense<0.000000e+00> : vector<8x128xf32>
    %104 = tpu.matmul %50, %103, %cst_52 {dimension_numbers = #tpu.dot_dimension_numbers<[1], [0], [0], [1], [0, 0, 1, 1], [], []>} : vector<8x128xbf16>, vector<128x128xbf16>, vector<8x128xf32> -> vector<8x128xf32>
    %c1_53 = arith.constant 1 : index
    %c0_54 = arith.constant 0 : index
    %c0_55 = arith.constant 0 : index
    %105 = vector.load %arg7[%c1_53, %c0_54, %c0_55] : memref<2x1x128xf32, #tpu.memory_space<vmem>>, vector<1x1x128xf32>
    %106 = vector.shape_cast %105 : vector<1x1x128xf32> to vector<1x128xf32>
    %107 = vector.broadcast %106 : vector<1x128xf32> to vector<8x128xf32>
    %108 = arith.addf %104, %107 : vector<8x128xf32>
    %c1_56 = arith.constant 1 : index
    %c0_57 = arith.constant 0 : index
    %c0_58 = arith.constant 0 : index
    %109 = vector.load %arg8[%c1_56, %c0_57, %c0_58] : memref<2x128x128xbf16, #tpu.memory_space<vmem>>, vector<1x128x128xbf16>
    %110 = vector.shape_cast %109 : vector<1x128x128xbf16> to vector<128x128xbf16>
    %cst_59 = arith.constant dense<0.000000e+00> : vector<16x128xf32>
    %111 = tpu.matmul %51, %110, %cst_59 {dimension_numbers = #tpu.dot_dimension_numbers<[1], [0], [0], [1], [0, 0, 1, 1], [], []>} : vector<16x128xbf16>, vector<128x128xbf16>, vector<16x128xf32> -> vector<16x128xf32>
    %c1_60 = arith.constant 1 : index
    %c0_61 = arith.constant 0 : index
    %c0_62 = arith.constant 0 : index
    %112 = vector.load %arg9[%c1_60, %c0_61, %c0_62] : memref<2x1x128xf32, #tpu.memory_space<vmem>>, vector<1x1x128xf32>
    %113 = vector.shape_cast %112 : vector<1x1x128xf32> to vector<1x128xf32>
    %114 = vector.broadcast %113 : vector<1x128xf32> to vector<16x128xf32>
    %115 = arith.addf %111, %114 : vector<16x128xf32>
    %c1_63 = arith.constant 1 : index
    %c0_64 = arith.constant 0 : index
    %c0_65 = arith.constant 0 : index
    %116 = vector.load %arg10[%c1_63, %c0_64, %c0_65] : memref<2x128x128xbf16, #tpu.memory_space<vmem>>, vector<1x128x128xbf16>
    %117 = vector.shape_cast %116 : vector<1x128x128xbf16> to vector<128x128xbf16>
    %cst_66 = arith.constant dense<0.000000e+00> : vector<16x128xf32>
    %118 = tpu.matmul %51, %117, %cst_66 {dimension_numbers = #tpu.dot_dimension_numbers<[1], [0], [0], [1], [0, 0, 1, 1], [], []>} : vector<16x128xbf16>, vector<128x128xbf16>, vector<16x128xf32> -> vector<16x128xf32>
    %c1_67 = arith.constant 1 : index
    %c0_68 = arith.constant 0 : index
    %c0_69 = arith.constant 0 : index
    %119 = vector.load %arg11[%c1_67, %c0_68, %c0_69] : memref<2x1x128xf32, #tpu.memory_space<vmem>>, vector<1x1x128xf32>
    %120 = vector.shape_cast %119 : vector<1x1x128xf32> to vector<1x128xf32>
    %121 = vector.broadcast %120 : vector<1x128xf32> to vector<16x128xf32>
    %122 = arith.addf %118, %121 : vector<16x128xf32>
    %cst_70 = arith.constant 0.0883883461 : f32
    %123 = vector.broadcast %cst_70 : f32 to vector<8x128xf32>
    %124 = arith.mulf %108, %123 : vector<8x128xf32>
    %125 = arith.truncf %124 : vector<8x128xf32> to vector<8x128xbf16>
    %126 = arith.truncf %115 : vector<16x128xf32> to vector<16x128xbf16>
    "tpu.trace_start"() <{level = 10 : i32, message = "qa,ka->qk"}> : () -> ()
    %cst_71 = arith.constant dense<0.000000e+00> : vector<8x16xf32>
    %127 = tpu.matmul %125, %126, %cst_71 {dimension_numbers = #tpu.dot_dimension_numbers<[1], [1], [0], [0], [0, 0, 1, 0], [], []>} : vector<8x128xbf16>, vector<16x128xbf16>, vector<8x16xf32> -> vector<8x16xf32>
    "tpu.trace_stop"() : () -> ()
    %128 = arith.negf %127 : vector<8x16xf32>
    %129 = math.exp %128 : vector<8x16xf32>
    %cst_72 = arith.constant 1.000000e+00 : f32
    %130 = vector.broadcast %cst_72 : f32 to vector<8x16xf32>
    %131 = arith.addf %130, %129 : vector<8x16xf32>
    %132 = arith.divf %130, %131 : vector<8x16xf32>
    %cst_73 = arith.constant dense<0xFF800000> : vector<8xf32>
    %133 = vector.multi_reduction <maximumf>, %132, %cst_73 [1] : vector<8x16xf32> to vector<8xf32>
    %134 = vector.shape_cast %133 : vector<8xf32> to vector<8x1xf32>
    %135 = vector.broadcast %134 : vector<8x1xf32> to vector<8x16xf32>
    %136 = arith.subf %132, %135 : vector<8x16xf32>
    %137 = math.exp %136 : vector<8x16xf32>
    %cst_74 = arith.constant dense<0.000000e+00> : vector<8xf32>
    %138 = vector.multi_reduction <add>, %137, %cst_74 [1] : vector<8x16xf32> to vector<8xf32>
    %139 = vector.shape_cast %138 : vector<8xf32> to vector<8x1xf32>
    %140 = tpu.reciprocal %139 {approx = true} : vector<8x1xf32> -> vector<8x1xf32>
    %141 = vector.broadcast %140 : vector<8x1xf32> to vector<8x16xf32>
    %142 = arith.mulf %137, %141 : vector<8x16xf32>
    %143 = arith.truncf %142 : vector<8x16xf32> to vector<8x16xbf16>
    %144 = arith.truncf %122 : vector<16x128xf32> to vector<16x128xbf16>
    %cst_75 = arith.constant dense<0.000000e+00> : vector<8x128xf32>
    %145 = tpu.matmul %143, %144, %cst_75 {dimension_numbers = #tpu.dot_dimension_numbers<[1], [0], [0], [1], [0, 0, 1, 1], [], []>} : vector<8x16xbf16>, vector<16x128xbf16>, vector<8x128xf32> -> vector<8x128xf32>
    %146 = arith.truncf %145 : vector<8x128xf32> to vector<8x128xbf16>
    %c1_76 = arith.constant 1 : index
    %c0_77 = arith.constant 0 : index
    %c0_78 = arith.constant 0 : index
    %147 = vector.load %arg12[%c1_76, %c0_77, %c0_78] : memref<2x128x128xbf16, #tpu.memory_space<vmem>>, vector<1x128x128xbf16>
    %148 = vector.shape_cast %147 : vector<1x128x128xbf16> to vector<128x128xbf16>
    %cst_79 = arith.constant dense<0.000000e+00> : vector<8x128xf32>
    %149 = tpu.matmul %146, %148, %cst_79 {dimension_numbers = #tpu.dot_dimension_numbers<[1], [0], [0], [1], [0, 0, 1, 1], [], []>} : vector<8x128xbf16>, vector<128x128xbf16>, vector<8x128xf32> -> vector<8x128xf32>
    %150 = arith.addf %101, %149 : vector<8x128xf32>
    %c0_80 = arith.constant 0 : index
    %c0_81 = arith.constant 0 : index
    %151 = vector.load %arg13[%c0_80, %c0_81] : memref<1x128xf32, #tpu.memory_space<vmem>>, vector<1x128xf32>
    %152 = vector.broadcast %151 : vector<1x128xf32> to vector<8x128xf32>
    %153 = arith.addf %150, %152 : vector<8x128xf32>
    %154 = arith.addf %1, %153 : vector<8x128xf32>
    %c0_82 = arith.constant 0 : index
    %c0_83 = arith.constant 0 : index
    %155 = vector.load %arg14[%c0_82, %c0_83] : memref<1x128xf32, #tpu.memory_space<vmem>>, vector<1x128xf32>
    %c0_84 = arith.constant 0 : index
    %c0_85 = arith.constant 0 : index
    %156 = vector.load %arg15[%c0_84, %c0_85] : memref<1x128xf32, #tpu.memory_space<vmem>>, vector<1x128xf32>
    %cst_86 = arith.constant dense<0.000000e+00> : vector<8xf32>
    %157 = vector.multi_reduction <add>, %154, %cst_86 [1] : vector<8x128xf32> to vector<8xf32>
    %158 = vector.shape_cast %157 : vector<8xf32> to vector<8x1xf32>
    %cst_87 = arith.constant 1.280000e+02 : f32
    %159 = vector.broadcast %cst_87 : f32 to vector<8x1xf32>
    %160 = arith.divf %158, %159 : vector<8x1xf32>
    %161 = vector.broadcast %160 : vector<8x1xf32> to vector<8x128xf32>
    %162 = arith.subf %154, %161 : vector<8x128xf32>
    %163 = arith.mulf %162, %162 : vector<8x128xf32>
    %cst_88 = arith.constant dense<0.000000e+00> : vector<8xf32>
    %164 = vector.multi_reduction <add>, %163, %cst_88 [1] : vector<8x128xf32> to vector<8xf32>
    %165 = vector.shape_cast %164 : vector<8xf32> to vector<8x1xf32>
    %cst_89 = arith.constant 1.280000e+02 : f32
    %166 = vector.broadcast %cst_89 : f32 to vector<8x1xf32>
    %167 = arith.divf %165, %166 : vector<8x1xf32>
    %168 = vector.broadcast %160 : vector<8x1xf32> to vector<8x128xf32>
    %169 = arith.subf %154, %168 : vector<8x128xf32>
    %cst_90 = arith.constant 9.99999974E-6 : f32
    %170 = vector.broadcast %cst_90 : f32 to vector<8x1xf32>
    %171 = arith.addf %167, %170 : vector<8x1xf32>
    %172 = math.rsqrt %171 : vector<8x1xf32>
    %173 = vector.broadcast %172 : vector<8x1xf32> to vector<8x128xf32>
    %174 = arith.mulf %169, %173 : vector<8x128xf32>
    %175 = vector.broadcast %155 : vector<1x128xf32> to vector<8x128xf32>
    %176 = arith.mulf %174, %175 : vector<8x128xf32>
    %177 = vector.broadcast %156 : vector<1x128xf32> to vector<8x128xf32>
    %178 = arith.addf %176, %177 : vector<8x128xf32>
    %179 = arith.truncf %178 : vector<8x128xf32> to vector<8x128xbf16>
    %c0_91 = arith.constant 0 : index
    %c0_92 = arith.constant 0 : index
    %180 = vector.load %arg16[%c0_91, %c0_92] : memref<128x256xbf16, #tpu.memory_space<vmem>>, vector<128x256xbf16>
    %cst_93 = arith.constant dense<0.000000e+00> : vector<8x256xf32>
    %181 = tpu.matmul %179, %180, %cst_93 {dimension_numbers = #tpu.dot_dimension_numbers<[1], [0], [0], [1], [0, 0, 1, 1], [], []>} : vector<8x128xbf16>, vector<128x256xbf16>, vector<8x256xf32> -> vector<8x256xf32>
    %c0_94 = arith.constant 0 : index
    %c0_95 = arith.constant 0 : index
    %182 = vector.load %arg17[%c0_94, %c0_95] : memref<1x256xf32, #tpu.memory_space<vmem>>, vector<1x256xf32>
    %183 = vector.broadcast %182 : vector<1x256xf32> to vector<8x256xf32>
    %184 = arith.addf %181, %183 : vector<8x256xf32>
    %cst_96 = arith.constant 5.000000e-01 : f32
    %185 = vector.broadcast %cst_96 : f32 to vector<8x256xf32>
    %186 = arith.mulf %185, %184 : vector<8x256xf32>
    %cst_97 = arith.constant 4.471500e-02 : f32
    %187 = vector.broadcast %cst_97 : f32 to vector<8x256xf32>
    %188 = arith.mulf %187, %184 : vector<8x256xf32>
    %189 = arith.mulf %188, %184 : vector<8x256xf32>
    %190 = arith.mulf %189, %184 : vector<8x256xf32>
    %191 = arith.addf %184, %190 : vector<8x256xf32>
    %cst_98 = arith.constant 0.797884583 : f32
    %192 = vector.broadcast %cst_98 : f32 to vector<8x256xf32>
    %193 = arith.mulf %192, %191 : vector<8x256xf32>
    %194 = math.tanh %193 : vector<8x256xf32>
    %cst_99 = arith.constant 1.000000e+00 : f32
    %195 = vector.broadcast %cst_99 : f32 to vector<8x256xf32>
    %196 = arith.addf %195, %194 : vector<8x256xf32>
    %197 = arith.mulf %186, %196 : vector<8x256xf32>
    %198 = arith.truncf %197 : vector<8x256xf32> to vector<8x256xbf16>
    %c0_100 = arith.constant 0 : index
    %c0_101 = arith.constant 0 : index
    %199 = vector.load %arg18[%c0_100, %c0_101] : memref<256x128xbf16, #tpu.memory_space<vmem>>, vector<256x128xbf16>
    %cst_102 = arith.constant dense<0.000000e+00> : vector<8x128xf32>
    %200 = tpu.matmul %198, %199, %cst_102 {dimension_numbers = #tpu.dot_dimension_numbers<[1], [0], [0], [1], [0, 0, 1, 1], [], []>} : vector<8x256xbf16>, vector<256x128xbf16>, vector<8x128xf32> -> vector<8x128xf32>
    %c0_103 = arith.constant 0 : index
    %c0_104 = arith.constant 0 : index
    %201 = vector.load %arg19[%c0_103, %c0_104] : memref<1x128xf32, #tpu.memory_space<vmem>>, vector<1x128xf32>
    %202 = vector.broadcast %201 : vector<1x128xf32> to vector<8x128xf32>
    %203 = arith.addf %200, %202 : vector<8x128xf32>
    %204 = arith.addf %154, %203 : vector<8x128xf32>
    %c0_105 = arith.constant 0 : index
    %c0_106 = arith.constant 0 : index
    %c0_107 = arith.constant 0 : index
    %205 = vector.load %arg20[%c0_105, %c0_106, %c0_107] : memref<1x8x128xf32, #tpu.memory_space<vmem>>, vector<1x8x128xf32>
    %206 = vector.shape_cast %205 : vector<1x8x128xf32> to vector<8x128xf32>
    %207 = vector.shape_cast %204 : vector<8x128xf32> to vector<1x8x128xf32>
    tpu.vector_store %arg20[%c0_105, %c0_106, %c0_107], %207 {strides = array<i32>} : memref<1x8x128xf32, #tpu.memory_space<vmem>>, vector<1x8x128xf32>,
    return
  }
  func.func @transform_0(%arg0: i32, %arg1: i32) -> (i32, i32, i32) {
    %c0_i32 = arith.constant 0 : i32
    %c0_i32_0 = arith.constant 0 : i32
    return %arg0, %arg1, %c0_i32 : i32, i32, i32
  }
  func.func @transform_1(%arg0: i32, %arg1: i32) -> (i32, i32, i32) {
    %c0_i32 = arith.constant 0 : i32
    %c0_i32_0 = arith.constant 0 : i32
    %c0_i32_1 = arith.constant 0 : i32
    return %arg0, %c0_i32, %c0_i32_0 : i32, i32, i32
  }
  func.func @transform_2(%arg0: i32, %arg1: i32) -> (i32, i32) {
    %c0_i32 = arith.constant 0 : i32
    %c0_i32_0 = arith.constant 0 : i32
    %c0_i32_1 = arith.constant 0 : i32
    return %c0_i32, %c0_i32_0 : i32, i32
  }
  func.func @transform_3(%arg0: i32, %arg1: i32) -> (i32, i32) {
    %c0_i32 = arith.constant 0 : i32
    %c0_i32_0 = arith.constant 0 : i32
    %c0_i32_1 = arith.constant 0 : i32
    return %c0_i32, %c0_i32_0 : i32, i32
  }
  func.func @transform_4(%arg0: i32, %arg1: i32) -> (i32, i32, i32) {
    %c0_i32 = arith.constant 0 : i32
    %c0_i32_0 = arith.constant 0 : i32
    %c0_i32_1 = arith.constant 0 : i32
    %c0_i32_2 = arith.constant 0 : i32
    return %c0_i32, %c0_i32_0, %c0_i32_1 : i32, i32, i32
  }
  func.func @transform_5(%arg0: i32, %arg1: i32) -> (i32, i32, i32) {
    %c0_i32 = arith.constant 0 : i32
    %c0_i32_0 = arith.constant 0 : i32
    %c0_i32_1 = arith.constant 0 : i32
    %c0_i32_2 = arith.constant 0 : i32
    return %c0_i32, %c0_i32_0, %c0_i32_1 : i32, i32, i32
  }
  func.func @transform_6(%arg0: i32, %arg1: i32) -> (i32, i32, i32) {
    %c0_i32 = arith.constant 0 : i32
    %c0_i32_0 = arith.constant 0 : i32
    %c0_i32_1 = arith.constant 0 : i32
    %c0_i32_2 = arith.constant 0 : i32
    return %c0_i32, %c0_i32_0, %c0_i32_1 : i32, i32, i32
  }
  func.func @transform_7(%arg0: i32, %arg1: i32) -> (i32, i32, i32) {
    %c0_i32 = arith.constant 0 : i32
    %c0_i32_0 = arith.constant 0 : i32
    %c0_i32_1 = arith.constant 0 : i32
    %c0_i32_2 = arith.constant 0 : i32
    return %c0_i32, %c0_i32_0, %c0_i32_1 : i32, i32, i32
  }
  func.func @transform_8(%arg0: i32, %arg1: i32) -> (i32, i32, i32) {
    %c0_i32 = arith.constant 0 : i32
    %c0_i32_0 = arith.constant 0 : i32
    %c0_i32_1 = arith.constant 0 : i32
    %c0_i32_2 = arith.constant 0 : i32
    return %c0_i32, %c0_i32_0, %c0_i32_1 : i32, i32, i32
  }
  func.func @transform_9(%arg0: i32, %arg1: i32) -> (i32, i32, i32) {
    %c0_i32 = arith.constant 0 : i32
    %c0_i32_0 = arith.constant 0 : i32
    %c0_i32_1 = arith.constant 0 : i32
    %c0_i32_2 = arith.constant 0 : i32
    return %c0_i32, %c0_i32_0, %c0_i32_1 : i32, i32, i32
  }
  func.func @transform_10(%arg0: i32, %arg1: i32) -> (i32, i32, i32) {
    %c0_i32 = arith.constant 0 : i32
    %c0_i32_0 = arith.constant 0 : i32
    %c0_i32_1 = arith.constant 0 : i32
    %c0_i32_2 = arith.constant 0 : i32
    return %c0_i32, %c0_i32_0, %c0_i32_1 : i32, i32, i32
  }
  func.func @transform_11(%arg0: i32, %arg1: i32) -> (i32, i32) {
    %c0_i32 = arith.constant 0 : i32
    %c0_i32_0 = arith.constant 0 : i32
    %c0_i32_1 = arith.constant 0 : i32
    return %c0_i32, %c0_i32_0 : i32, i32
  }
  func.func @transform_12(%arg0: i32, %arg1: i32) -> (i32, i32) {
    %c0_i32 = arith.constant 0 : i32
    %c0_i32_0 = arith.constant 0 : i32
    %c0_i32_1 = arith.constant 0 : i32
    return %c0_i32, %c0_i32_0 : i32, i32
  }
  func.func @transform_13(%arg0: i32, %arg1: i32) -> (i32, i32) {
    %c0_i32 = arith.constant 0 : i32
    %c0_i32_0 = arith.constant 0 : i32
    %c0_i32_1 = arith.constant 0 : i32
    return %c0_i32, %c0_i32_0 : i32, i32
  }
  func.func @transform_14(%arg0: i32, %arg1: i32) -> (i32, i32) {
    %c0_i32 = arith.constant 0 : i32
    %c0_i32_0 = arith.constant 0 : i32
    %c0_i32_1 = arith.constant 0 : i32
    return %c0_i32, %c0_i32_0 : i32, i32
  }
  func.func @transform_15(%arg0: i32, %arg1: i32) -> (i32, i32) {
    %c0_i32 = arith.constant 0 : i32
    %c0_i32_0 = arith.constant 0 : i32
    %c0_i32_1 = arith.constant 0 : i32
    return %c0_i32, %c0_i32_0 : i32, i32
  }
  func.func @transform_16(%arg0: i32, %arg1: i32) -> (i32, i32) {
    %c0_i32 = arith.constant 0 : i32
    %c0_i32_0 = arith.constant 0 : i32
    %c0_i32_1 = arith.constant 0 : i32
    return %c0_i32, %c0_i32_0 : i32, i32
  }
  func.func @transform_17(%arg0: i32, %arg1: i32) -> (i32, i32) {
    %c0_i32 = arith.constant 0 : i32
    %c0_i32_0 = arith.constant 0 : i32
    %c0_i32_1 = arith.constant 0 : i32
    return %c0_i32, %c0_i32_0 : i32, i32
  }
  func.func @transform_18(%arg0: i32, %arg1: i32) -> (i32, i32, i32) {
    %c0_i32 = arith.constant 0 : i32
    %c0_i32_0 = arith.constant 0 : i32
    return %arg0, %arg1, %c0_i32 : i32, i32, i32
  }
}

</mosaic_0001>

<llo_original>
// kernel: tpu_custom_call.1
$region0: #{tpu_custom_call.1}
  #allocation0 [shape = 'u32[]', space=smem, size = 0x4, offset = 0x4, fixed_abs, tag = 'smem constant byte address 0x4 - core index']
  #allocation1 [shape = 'u32[144,128]{1,0:T(1,128)}', space=vmem, size = 0x12000, scoped, tag = 'internal scratch']
  %s0 = inlined_call_operand.hbm [shape: f32[2,16,128], index: 0, kind: input, shape index: {}]
  %s1 = inlined_call_operand.hbm [shape: f32[2,16,128], index: 1, kind: input, shape index: {}]
  %s2 = inlined_call_operand.vmem [shape: f32[1,128], index: 2, kind: input, shape index: {}]
  %s3 = inlined_call_operand.vmem [shape: f32[1,128], index: 3, kind: input, shape index: {}]
  %s4 = inlined_call_operand.hbm [shape: bf16[2,128,128], index: 4, kind: input, shape index: {}]
  %s5 = inlined_call_operand.vmem [shape: f32[2,1,128], index: 5, kind: input, shape index: {}]
  %s6 = inlined_call_operand.hbm [shape: bf16[2,128,128], index: 6, kind: input, shape index: {}]
  %s7 = inlined_call_operand.vmem [shape: f32[2,1,128], index: 7, kind: input, shape index: {}]
  %s8 = inlined_call_operand.hbm [shape: bf16[2,128,128], index: 8, kind: input, shape index: {}]
  %s9 = inlined_call_operand.vmem [shape: f32[2,1,128], index: 9, kind: input, shape index: {}]
  %s10 = inlined_call_operand.hbm [shape: bf16[2,128,128], index: 10, kind: input, shape index: {}]
  %s11 = inlined_call_operand.vmem [shape: f32[1,128], index: 11, kind: input, shape index: {}]
  %s12 = inlined_call_operand.vmem [shape: f32[1,128], index: 12, kind: input, shape index: {}]
  %s13 = inlined_call_operand.vmem [shape: f32[1,128], index: 13, kind: input, shape index: {}]
  %s14 = inlined_call_operand.hbm [shape: bf16[128,256], index: 14, kind: input, shape index: {}]
  %s15 = inlined_call_operand.vmem [shape: f32[1,256], index: 15, kind: input, shape index: {}]
  %s16 = inlined_call_operand.hbm [shape: bf16[256,128], index: 16, kind: input, shape index: {}]
  %s17 = inlined_call_operand.vmem [shape: f32[1,128], index: 17, kind: input, shape index: {}]
  %s18 = inlined_call_operand.hbm [shape: f32[2,16,128], index: 18, kind: output, shape index: {}]
  %s19 = sld [smem:[#allocation0]]
  $region137: #{tpu_custom_call.1} parent=0
    _
  %s21 = ssub.s32 1, %s19
  %s22 = scalar_select 0, %s21, %s19
  $region1: #{tpu_custom_call.1} parent=0
    #allocation2 [shape = 'u8[8192]{0}', space=vmem, size = 0x2000, scoped, tag = 'input window, operand 0']
    #allocation3 [shape = 's32[2]{0}', space=sflag, size = 0x8, scoped, tag = 'scoped memory for tpu_custom_call.1']
    #allocation4 [shape = 's32[2]{0}', space=sflag, size = 0x8, scoped, tag = 'scoped memory for tpu_custom_call.1']
    #allocation5 [shape = 'u8[16384]{0}', space=vmem, size = 0x4000, scoped, tag = 'input window, operand 1']
    #allocation6 [shape = 's32[2]{0}', space=sflag, size = 0x8, scoped, tag = 'scoped memory for tpu_custom_call.1']
    #allocation7 [shape = 'u8[65536]{0}', space=vmem, size = 0x10000, scoped, tag = 'input window, operand 4, single buffered']
    #allocation8 [shape = 'u8[65536]{0}', space=vmem, size = 0x10000, scoped, tag = 'input window, operand 6, single buffered']
    #allocation9 [shape = 's32[1]{0}', space=sflag, size = 0x4, scoped, tag = 'scoped memory for tpu_custom_call.1']
    #allocation10 [shape = 'u8[65536]{0}', space=vmem, size = 0x10000, scoped, tag = 'input window, operand 8, single buffered']
    #allocation11 [shape = 'u8[65536]{0}', space=vmem, size = 0x10000, scoped, tag = 'input window, operand 10, single buffered']
    #allocation12 [shape = 's32[1]{0}', space=sflag, size = 0x4, scoped, tag = 'scoped memory for tpu_custom_call.1']
    #allocation13 [shape = 'u8[65536]{0}', space=vmem, size = 0x10000, scoped, tag = 'input window, operand 14, single buffered']
    #allocation14 [shape = 'u8[65536]{0}', space=vmem, size = 0x10000, scoped, tag = 'input window, operand 16, single buffered']
    #allocation15 [shape = 's32[1]{0}', space=sflag, size = 0x4, scoped, tag = 'scoped memory for tpu_custom_call.1']
    #allocation16 [shape = 'u8[8192]{0}', space=vmem, size = 0x2000, scoped, tag = 'output window, operand 0']
    %23 = vsyncpa [#allocation3], 0
    %s24 = scalar_lea.sflag [#allocation3], 1
    %25 = vsyncpa %s24, 0
    %26 = vsyncpa [#allocation6], 0
    %s27 = scalar_lea.sflag [#allocation6], 1
    %28 = vsyncpa %s27, 0
    %29 = vsyncpa [#allocation9], 0
    %30 = vsyncpa [#allocation12], 0
    %31 = vsyncpa [#allocation15], 0
    %32 = vsyncpa [#allocation4], 0
    %s33 = scalar_lea.sflag [#allocation4], 1
    %34 = vsyncpa %s33, 0
    loop: start=0, step=1, limit=6
    $region2: #{tpu_custom_call.1} parent=1 // loop_pre_header
      _
    $region3: #{tpu_custom_call.1} parent=1 // loop_header
      %s36 = sphi 0, %s40
      %p37 = scmp.ge.s32.totalorder %s36, 6
      %s43 = sphi 0, %s55
      %s44 = sphi 0, %s51
      %s45 = sphi 0, %s43
      %s46 = sphi 0, %s44
      %s47 = sphi 0, %s45
      %s48 = sphi 0, %s46
      %s60 = sphi 0, %s62
      %s63 = sphi 0, %s60
      %s64 = sphi 0, %s63
      %s80 = sphi 0, %s64
      %s86 = sphi 0, %s88
      %s89 = sphi 0, %s86
      %s90 = sphi 0, %s89
      %s106 = sphi 0, %s90
      %s110 = sphi 0, %s110
      %s112 = sphi 0, %s110
      %s113 = sphi 0, %s112
      %s127 = sphi 0, %s113
      %s131 = sphi 0, %s131
      %s133 = sphi 0, %s131
      %s134 = sphi 0, %s133
      %s148 = sphi 0, %s134
      %s152 = sphi 0, %s152
      %s154 = sphi 0, %s152
      %s155 = sphi 0, %s154
      %s169 = sphi 0, %s155
      %s173 = sphi 0, %s173
      %s175 = sphi 0, %s173
      %s176 = sphi 0, %s175
      %s190 = sphi 0, %s176
      %s194 = sphi 0, %s194
      %s196 = sphi 0, %s194
      %s197 = sphi 0, %s196
      %s211 = sphi 0, %s197
      %s215 = sphi 0, %s215
      %s217 = sphi 0, %s215
      %s218 = sphi 0, %s217
      %s232 = sphi 0, %s218
      %s236 = sphi 0, %s236
      %s238 = sphi 0, %s236
      %s239 = sphi 0, %s238
      %s253 = sphi 0, %s239
      %s257 = sphi 0, %s257
      %s259 = sphi 0, %s257
      %s260 = sphi 0, %s259
      %s274 = sphi 0, %s260
      %s278 = sphi 0, %s278
      %s280 = sphi 0, %s278
      %s281 = sphi 0, %s280
      %s295 = sphi 0, %s281
      %s299 = sphi 0, %s299
      %s301 = sphi 0, %s299
      %s302 = sphi 0, %s301
      %s316 = sphi 0, %s302
      %s320 = sphi 0, %s320
      %s322 = sphi 0, %s320
      %s323 = sphi 0, %s322
      %s337 = sphi 0, %s323
      %s341 = sphi 0, %s341
      %s343 = sphi 0, %s341
      %s344 = sphi 0, %s343
      %s358 = sphi 0, %s344
      %s362 = sphi 0, %s362
      %s364 = sphi 0, %s362
      %s365 = sphi 0, %s364
      %s379 = sphi 0, %s365
      %s383 = sphi 0, %s383
      %s385 = sphi 0, %s383
      %s386 = sphi 0, %s385
      %s400 = sphi 0, %s386
      %s404 = sphi 0, %s404
      %s406 = sphi 0, %s404
      %s407 = sphi 0, %s406
      %s421 = sphi 0, %s407
      %s425 = sphi 0, %s425
      %s427 = sphi 0, %s425
      %s428 = sphi 0, %s427
      %s442 = sphi 0, %s428
      %s450 = sphi 0, %s452
      %s453 = sphi 0, %s450
      %s454 = sphi 0, %s453
      %s470 = sphi 0, %s454
    $region4: #{tpu_custom_call.1} parent=1 // loop_header_branch
      %39 = sbr.rel (%p37) target = $region8
    $region5: #{tpu_custom_call.1} parent=1 // loop_body
      %s41 = ssub.s32 %s36, 1
      %s42 = ssub.s32 %s36, 2
      %s49 = sadd.s32 1, %s44
      %p50 = scmp.ge.s32.totalorder %s49, 2
      %s51 = scalar_select %p50, 0, %s49
      %s52 = sadd.s32 1, %s43
      %s53 = scalar_select %p50, %s52, %s43
      %p54 = scmp.ge.s32.totalorder %s53, 2
      %s55 = scalar_select %p54, 0, %s53
      %s56 = ssub.s32 %s43, %s55
      %s57 = ssub.s32 %s44, %s51
      %s58 = sor.u32 %s56, %s57
      %p59 = scmp.eq.s32.totalorder %s58, 0
      %s61 = sadd.s32 %s60, 1
      %s62 = scalar_select %p59, %s60, %s61
      %p65 = pneg %p59
      %p66 = scmp.eq.s32.totalorder %s36, 3
      %p67 = por %p65, %p66
      %p68 = scmp.ne.s32.totalorder %s60, %s63
      %p69 = scmp.eq.s32.totalorder %s36, 0
      %p70 = por %p68, %p69
      %p71 = scmp.ne.s32.totalorder %s60, %s63
      %p72 = scmp.eq.s32.totalorder %s41, 3
      %p73 = por %p71, %p72
      %p74 = scmp.ne.s32.totalorder %s63, %s64
      %p75 = scmp.eq.s32.totalorder %s41, 0
      %p76 = por %p74, %p75
      %p77 = scmp.ne.s32.totalorder %s63, %s64
      %p78 = scmp.eq.s32.totalorder %s42, 3
      %p79 = por %p77, %p78
      %p81 = scmp.ne.s32.totalorder %s64, %s80
      %p82 = scmp.eq.s32.totalorder %s42, 0
      %p83 = por %p81, %p82
      %s84 = ssub.s32 %s43, %s55
      %p85 = scmp.eq.s32.totalorder %s84, 0
      %s87 = sadd.s32 %s86, 1
      %s88 = scalar_select %p85, %s86, %s87
      %p91 = pneg %p85
      %p92 = scmp.eq.s32.totalorder %s36, 3
      %p93 = por %p91, %p92
      %p94 = scmp.ne.s32.totalorder %s86, %s89
      %p95 = scmp.eq.s32.totalorder %s36, 0
      %p96 = por %p94, %p95
      %p97 = scmp.ne.s32.totalorder %s86, %s89
      %p98 = scmp.eq.s32.totalorder %s41, 3
      %p99 = por %p97, %p98
      %p100 = scmp.ne.s32.totalorder %s89, %s90
      %p101 = scmp.eq.s32.totalorder %s41, 0
      %p102 = por %p100, %p101
      %p103 = scmp.ne.s32.totalorder %s89, %s90
      %p104 = scmp.eq.s32.totalorder %s42, 3
      %p105 = por %p103, %p104
      %p107 = scmp.ne.s32.totalorder %s90, %s106
      %p108 = scmp.eq.s32.totalorder %s42, 0
      %p109 = por %p107, %p108
      %s111 = sadd.s32 %s110, 1
      %p114 = scmp.eq.s32.totalorder %s36, 3
      %p115 = scmp.ne.s32.totalorder %s110, %s112
      %p116 = scmp.eq.s32.totalorder %s36, 0
      %p117 = por %p115, %p116
      %p118 = scmp.ne.s32.totalorder %s110, %s112
      %p119 = scmp.eq.s32.totalorder %s41, 3
      %p120 = por %p118, %p119
      %p121 = scmp.ne.s32.totalorder %s112, %s113
      %p122 = scmp.eq.s32.totalorder %s41, 0
      %p123 = por %p121, %p122
      %p124 = scmp.ne.s32.totalorder %s112, %s113
      %p125 = scmp.eq.s32.totalorder %s42, 3
      %p126 = por %p124, %p125
      %p128 = scmp.ne.s32.totalorder %s113, %s127
      %p129 = scmp.eq.s32.totalorder %s42, 0
      %p130 = por %p128, %p129
      %s132 = sadd.s32 %s131, 1
      %p135 = scmp.eq.s32.totalorder %s36, 3
      %p136 = scmp.ne.s32.totalorder %s131, %s133
      %p137 = scmp.eq.s32.totalorder %s36, 0
      %p138 = por %p136, %p137
      %p139 = scmp.ne.s32.totalorder %s131, %s133
      %p140 = scmp.eq.s32.totalorder %s41, 3
      %p141 = por %p139, %p140
      %p142 = scmp.ne.s32.totalorder %s133, %s134
      %p143 = scmp.eq.s32.totalorder %s41, 0
      %p144 = por %p142, %p143
      %p145 = scmp.ne.s32.totalorder %s133, %s134
      %p146 = scmp.eq.s32.totalorder %s42, 3
      %p147 = por %p145, %p146
      %p149 = scmp.ne.s32.totalorder %s134, %s148
      %p150 = scmp.eq.s32.totalorder %s42, 0
      %p151 = por %p149, %p150
      %s153 = sadd.s32 %s152, 1
      %p156 = scmp.eq.s32.totalorder %s36, 3
      %p157 = scmp.ne.s32.totalorder %s152, %s154
      %p158 = scmp.eq.s32.totalorder %s36, 0
      %p159 = por %p157, %p158
      %p160 = scmp.ne.s32.totalorder %s152, %s154
      %p161 = scmp.eq.s32.totalorder %s41, 3
      %p162 = por %p160, %p161
      %p163 = scmp.ne.s32.totalorder %s154, %s155
      %p164 = scmp.eq.s32.totalorder %s41, 0
      %p165 = por %p163, %p164
      %p166 = scmp.ne.s32.totalorder %s154, %s155
      %p167 = scmp.eq.s32.totalorder %s42, 3
      %p168 = por %p166, %p167
      %p170 = scmp.ne.s32.totalorder %s155, %s169
      %p171 = scmp.eq.s32.totalorder %s42, 0
      %p172 = por %p170, %p171
      %s174 = sadd.s32 %s173, 1
      %p177 = scmp.eq.s32.totalorder %s36, 3
      %p178 = scmp.ne.s32.totalorder %s173, %s175
      %p179 = scmp.eq.s32.totalorder %s36, 0
      %p180 = por %p178, %p179
      %p181 = scmp.ne.s32.totalorder %s173, %s175
      %p182 = scmp.eq.s32.totalorder %s41, 3
      %p183 = por %p181, %p182
      %p184 = scmp.ne.s32.totalorder %s175, %s176
      %p185 = scmp.eq.s32.totalorder %s41, 0
      %p186 = por %p184, %p185
      %p187 = scmp.ne.s32.totalorder %s175, %s176
      %p188 = scmp.eq.s32.totalorder %s42, 3
      %p189 = por %p187, %p188
      %p191 = scmp.ne.s32.totalorder %s176, %s190
      %p192 = scmp.eq.s32.totalorder %s42, 0
      %p193 = por %p191, %p192
      %s195 = sadd.s32 %s194, 1
      %p198 = scmp.eq.s32.totalorder %s36, 3
      %p199 = scmp.ne.s32.totalorder %s194, %s196
      %p200 = scmp.eq.s32.totalorder %s36, 0
      %p201 = por %p199, %p200
      %p202 = scmp.ne.s32.totalorder %s194, %s196
      %p203 = scmp.eq.s32.totalorder %s41, 3
      %p204 = por %p202, %p203
      %p205 = scmp.ne.s32.totalorder %s196, %s197
      %p206 = scmp.eq.s32.totalorder %s41, 0
      %p207 = por %p205, %p206
      %p208 = scmp.ne.s32.totalorder %s196, %s197
      %p209 = scmp.eq.s32.totalorder %s42, 3
      %p210 = por %p208, %p209
      %p212 = scmp.ne.s32.totalorder %s197, %s211
      %p213 = scmp.eq.s32.totalorder %s42, 0
      %p214 = por %p212, %p213
      %s216 = sadd.s32 %s215, 1
      %p219 = scmp.eq.s32.totalorder %s36, 3
      %p220 = scmp.ne.s32.totalorder %s215, %s217
      %p221 = scmp.eq.s32.totalorder %s36, 0
      %p222 = por %p220, %p221
      %p223 = scmp.ne.s32.totalorder %s215, %s217
      %p224 = scmp.eq.s32.totalorder %s41, 3
      %p225 = por %p223, %p224
      %p226 = scmp.ne.s32.totalorder %s217, %s218
      %p227 = scmp.eq.s32.totalorder %s41, 0
      %p228 = por %p226, %p227
      %p229 = scmp.ne.s32.totalorder %s217, %s218
      %p230 = scmp.eq.s32.totalorder %s42, 3
      %p231 = por %p229, %p230
      %p233 = scmp.ne.s32.totalorder %s218, %s232
      %p234 = scmp.eq.s32.totalorder %s42, 0
      %p235 = por %p233, %p234
      %s237 = sadd.s32 %s236, 1
      %p240 = scmp.eq.s32.totalorder %s36, 3
      %p241 = scmp.ne.s32.totalorder %s236, %s238
      %p242 = scmp.eq.s32.totalorder %s36, 0
      %p243 = por %p241, %p242
      %p244 = scmp.ne.s32.totalorder %s236, %s238
      %p245 = scmp.eq.s32.totalorder %s41, 3
      %p246 = por %p244, %p245
      %p247 = scmp.ne.s32.totalorder %s238, %s239
      %p248 = scmp.eq.s32.totalorder %s41, 0
      %p249 = por %p247, %p248
      %p250 = scmp.ne.s32.totalorder %s238, %s239
      %p251 = scmp.eq.s32.totalorder %s42, 3
      %p252 = por %p250, %p251
      %p254 = scmp.ne.s32.totalorder %s239, %s253
      %p255 = scmp.eq.s32.totalorder %s42, 0
      %p256 = por %p254, %p255
      %s258 = sadd.s32 %s257, 1
      %p261 = scmp.eq.s32.totalorder %s36, 3
      %p262 = scmp.ne.s32.totalorder %s257, %s259
      %p263 = scmp.eq.s32.totalorder %s36, 0
      %p264 = por %p262, %p263
      %p265 = scmp.ne.s32.totalorder %s257, %s259
      %p266 = scmp.eq.s32.totalorder %s41, 3
      %p267 = por %p265, %p266
      %p268 = scmp.ne.s32.totalorder %s259, %s260
      %p269 = scmp.eq.s32.totalorder %s41, 0
      %p270 = por %p268, %p269
      %p271 = scmp.ne.s32.totalorder %s259, %s260
      %p272 = scmp.eq.s32.totalorder %s42, 3
      %p273 = por %p271, %p272
      %p275 = scmp.ne.s32.totalorder %s260, %s274
      %p276 = scmp.eq.s32.totalorder %s42, 0
      %p277 = por %p275, %p276
      %s279 = sadd.s32 %s278, 1
      %p282 = scmp.eq.s32.totalorder %s36, 3
      %p283 = scmp.ne.s32.totalorder %s278, %s280
      %p284 = scmp.eq.s32.totalorder %s36, 0
      %p285 = por %p283, %p284
      %p286 = scmp.ne.s32.totalorder %s278, %s280
      %p287 = scmp.eq.s32.totalorder %s41, 3
      %p288 = por %p286, %p287
      %p289 = scmp.ne.s32.totalorder %s280, %s281
      %p290 = scmp.eq.s32.totalorder %s41, 0
      %p291 = por %p289, %p290
      %p292 = scmp.ne.s32.totalorder %s280, %s281
      %p293 = scmp.eq.s32.totalorder %s42, 3
      %p294 = por %p292, %p293
      %p296 = scmp.ne.s32.totalorder %s281, %s295
      %p297 = scmp.eq.s32.totalorder %s42, 0
      %p298 = por %p296, %p297
      %s300 = sadd.s32 %s299, 1
      %p303 = scmp.eq.s32.totalorder %s36, 3
      %p304 = scmp.ne.s32.totalorder %s299, %s301
      %p305 = scmp.eq.s32.totalorder %s36, 0
      %p306 = por %p304, %p305
      %p307 = scmp.ne.s32.totalorder %s299, %s301
      %p308 = scmp.eq.s32.totalorder %s41, 3
      %p309 = por %p307, %p308
      %p310 = scmp.ne.s32.totalorder %s301, %s302
      %p311 = scmp.eq.s32.totalorder %s41, 0
      %p312 = por %p310, %p311
      %p313 = scmp.ne.s32.totalorder %s301, %s302
      %p314 = scmp.eq.s32.totalorder %s42, 3
      %p315 = por %p313, %p314
      %p317 = scmp.ne.s32.totalorder %s302, %s316
      %p318 = scmp.eq.s32.totalorder %s42, 0
      %p319 = por %p317, %p318
      %s321 = sadd.s32 %s320, 1
      %p324 = scmp.eq.s32.totalorder %s36, 3
      %p325 = scmp.ne.s32.totalorder %s320, %s322
      %p326 = scmp.eq.s32.totalorder %s36, 0
      %p327 = por %p325, %p326
      %p328 = scmp.ne.s32.totalorder %s320, %s322
      %p329 = scmp.eq.s32.totalorder %s41, 3
      %p330 = por %p328, %p329
      %p331 = scmp.ne.s32.totalorder %s322, %s323
      %p332 = scmp.eq.s32.totalorder %s41, 0
      %p333 = por %p331, %p332
      %p334 = scmp.ne.s32.totalorder %s322, %s323
      %p335 = scmp.eq.s32.totalorder %s42, 3
      %p336 = por %p334, %p335
      %p338 = scmp.ne.s32.totalorder %s323, %s337
      %p339 = scmp.eq.s32.totalorder %s42, 0
      %p340 = por %p338, %p339
      %s342 = sadd.s32 %s341, 1
      %p345 = scmp.eq.s32.totalorder %s36, 3
      %p346 = scmp.ne.s32.totalorder %s341, %s343
      %p347 = scmp.eq.s32.totalorder %s36, 0
      %p348 = por %p346, %p347
      %p349 = scmp.ne.s32.totalorder %s341, %s343
      %p350 = scmp.eq.s32.totalorder %s41, 3
      %p351 = por %p349, %p350
      %p352 = scmp.ne.s32.totalorder %s343, %s344
      %p353 = scmp.eq.s32.totalorder %s41, 0
      %p354 = por %p352, %p353
      %p355 = scmp.ne.s32.totalorder %s343, %s344
      %p356 = scmp.eq.s32.totalorder %s42, 3
      %p357 = por %p355, %p356
      %p359 = scmp.ne.s32.totalorder %s344, %s358
      %p360 = scmp.eq.s32.totalorder %s42, 0
      %p361 = por %p359, %p360
      %s363 = sadd.s32 %s362, 1
      %p366 = scmp.eq.s32.totalorder %s36, 3
      %p367 = scmp.ne.s32.totalorder %s362, %s364
      %p368 = scmp.eq.s32.totalorder %s36, 0
      %p369 = por %p367, %p368
      %p370 = scmp.ne.s32.totalorder %s362, %s364
      %p371 = scmp.eq.s32.totalorder %s41, 3
      %p372 = por %p370, %p371
      %p373 = scmp.ne.s32.totalorder %s364, %s365
      %p374 = scmp.eq.s32.totalorder %s41, 0
      %p375 = por %p373, %p374
      %p376 = scmp.ne.s32.totalorder %s364, %s365
      %p377 = scmp.eq.s32.totalorder %s42, 3
      %p378 = por %p376, %p377
      %p380 = scmp.ne.s32.totalorder %s365, %s379
      %p381 = scmp.eq.s32.totalorder %s42, 0
      %p382 = por %p380, %p381
      %s384 = sadd.s32 %s383, 1
      %p387 = scmp.eq.s32.totalorder %s36, 3
      %p388 = scmp.ne.s32.totalorder %s383, %s385
      %p389 = scmp.eq.s32.totalorder %s36, 0
      %p390 = por %p388, %p389
      %p391 = scmp.ne.s32.totalorder %s383, %s385
      %p392 = scmp.eq.s32.totalorder %s41, 3
      %p393 = por %p391, %p392
      %p394 = scmp.ne.s32.totalorder %s385, %s386
      %p395 = scmp.eq.s32.totalorder %s41, 0
      %p396 = por %p394, %p395
      %p397 = scmp.ne.s32.totalorder %s385, %s386
      %p398 = scmp.eq.s32.totalorder %s42, 3
      %p399 = por %p397, %p398
      %p401 = scmp.ne.s32.totalorder %s386, %s400
      %p402 = scmp.eq.s32.totalorder %s42, 0
      %p403 = por %p401, %p402
      %s405 = sadd.s32 %s404, 1
      %p408 = scmp.eq.s32.totalorder %s36, 3
      %p409 = scmp.ne.s32.totalorder %s404, %s406
      %p410 = scmp.eq.s32.totalorder %s36, 0
      %p411 = por %p409, %p410
      %p412 = scmp.ne.s32.totalorder %s404, %s406
      %p413 = scmp.eq.s32.totalorder %s41, 3
      %p414 = por %p412, %p413
      %p415 = scmp.ne.s32.totalorder %s406, %s407
      %p416 = scmp.eq.s32.totalorder %s41, 0
      %p417 = por %p415, %p416
      %p418 = scmp.ne.s32.totalorder %s406, %s407
      %p419 = scmp.eq.s32.totalorder %s42, 3
      %p420 = por %p418, %p419
      %p422 = scmp.ne.s32.totalorder %s407, %s421
      %p423 = scmp.eq.s32.totalorder %s42, 0
      %p424 = por %p422, %p423
      %s426 = sadd.s32 %s425, 1
      %p429 = scmp.eq.s32.totalorder %s36, 3
      %p430 = scmp.ne.s32.totalorder %s425, %s427
      %p431 = scmp.eq.s32.totalorder %s36, 0
      %p432 = por %p430, %p431
      %p433 = scmp.ne.s32.totalorder %s425, %s427
      %p434 = scmp.eq.s32.totalorder %s41, 3
      %p435 = por %p433, %p434
      %p436 = scmp.ne.s32.totalorder %s427, %s428
      %p437 = scmp.eq.s32.totalorder %s41, 0
      %p438 = por %p436, %p437
      %p439 = scmp.ne.s32.totalorder %s427, %s428
      %p440 = scmp.eq.s32.totalorder %s42, 3
      %p441 = por %p439, %p440
      %p443 = scmp.ne.s32.totalorder %s428, %s442
      %p444 = scmp.eq.s32.totalorder %s42, 0
      %p445 = por %p443, %p444
      %s446 = ssub.s32 %s43, %s55
      %s447 = ssub.s32 %s44, %s51
      %s448 = sor.u32 %s446, %s447
      %p449 = scmp.eq.s32.totalorder %s448, 0
      %s451 = sadd.s32 %s450, 1
      %s452 = scalar_select %p449, %s450, %s451
      %p455 = pneg %p449
      %p456 = scmp.eq.s32.totalorder %s36, 3
      %p457 = por %p455, %p456
      %p458 = scmp.ne.s32.totalorder %s450, %s453
      %p459 = scmp.eq.s32.totalorder %s36, 0
      %p460 = por %p458, %p459
      %p461 = scmp.ne.s32.totalorder %s450, %s453
      %p462 = scmp.eq.s32.totalorder %s41, 3
      %p463 = por %p461, %p462
      %p464 = scmp.ne.s32.totalorder %s453, %s454
      %p465 = scmp.eq.s32.totalorder %s41, 0
      %p466 = por %p464, %p465
      %p467 = scmp.ne.s32.totalorder %s453, %s454
      %p468 = scmp.eq.s32.totalorder %s42, 3
      %p469 = por %p467, %p468
      %p471 = scmp.ne.s32.totalorder %s454, %s470
      %p472 = scmp.eq.s32.totalorder %s42, 0
      %p473 = por %p471, %p472
      %p474 = scmp.le.s32.totalorder 1, %s36
      %p475 = scmp.lt.s32.totalorder %s36, 5
      %p476 = pnand %p474, %p475
      %p477 = pneg %p476
      // Predicated region
      $region9: #{tpu_custom_call.1} parent=5 // pred_check
        _
      $region10: #{tpu_custom_call.1} parent=5 // pred_check_branch
        %479 = sbr.rel (%p476) target = $region12
      $region11: #{tpu_custom_call.1} parent=5 // pred_region
        %s480 = ssub.s32 %s36, 1
        // Predicated region
        $region13: #{tpu_custom_call.1} parent=11 // pred_check
          %p481 = pneg %p123
        $region14: #{tpu_custom_call.1} parent=11 // pred_check_branch
          %483 = sbr.rel (%p481) target = $region16
        $region15: #{tpu_custom_call.1} parent=11 // pred_region
          _
        $region16: #{tpu_custom_call.1} parent=11 // pred_fallthru
          _
        // Predicated region
        $region17: #{tpu_custom_call.1} parent=11 // pred_check
          %p484 = pneg %p144
        $region18: #{tpu_custom_call.1} parent=11 // pred_check_branch
          %486 = sbr.rel (%p484) target = $region20
        $region19: #{tpu_custom_call.1} parent=11 // pred_region
          _
        $region20: #{tpu_custom_call.1} parent=11 // pred_fallthru
          _
        // Predicated region
        $region21: #{tpu_custom_call.1} parent=11 // pred_check
          %p487 = pneg %p165
        $region22: #{tpu_custom_call.1} parent=11 // pred_check_branch
          %489 = sbr.rel (%p487) target = $region24
        $region23: #{tpu_custom_call.1} parent=11 // pred_region
          %s491 = ssub.s32 2048, 2048
          %492 = vsyncadd [#allocation6], %s491
          %s493 = sshll.u32 [#allocation7], 4
          %s494 = int_to_ptr.vmem [resolvable:$true] %s493
          %499 = dma.hbm_to_vmem [thread:$0]  %s4, 2048, %s494, [#allocation6], 64, 64, 4
        $region24: #{tpu_custom_call.1} parent=11 // pred_fallthru
          _
        // Predicated region
        $region25: #{tpu_custom_call.1} parent=11 // pred_check
          %p500 = pneg %p186
        $region26: #{tpu_custom_call.1} parent=11 // pred_check_branch
          %502 = sbr.rel (%p500) target = $region28
        $region27: #{tpu_custom_call.1} parent=11 // pred_region
          _
        $region28: #{tpu_custom_call.1} parent=11 // pred_fallthru
          _
        // Predicated region
        $region29: #{tpu_custom_call.1} parent=11 // pred_check
          %p503 = pneg %p207
        $region30: #{tpu_custom_call.1} parent=11 // pred_check_branch
          %505 = sbr.rel (%p503) target = $region32
        $region31: #{tpu_custom_call.1} parent=11 // pred_region
          %s507 = ssub.s32 2048, 2048
          %508 = vsyncadd [#allocation9], %s507
          %s509 = sshll.u32 [#allocation8], 4
          %s510 = int_to_ptr.vmem [resolvable:$true] %s509
          %515 = dma.hbm_to_vmem [thread:$0]  %s6, 2048, %s510, [#allocation9], 64, 64, 4
        $region32: #{tpu_custom_call.1} parent=11 // pred_fallthru
          _
        // Predicated region
        $region33: #{tpu_custom_call.1} parent=11 // pred_check
          %p516 = pneg %p228
        $region34: #{tpu_custom_call.1} parent=11 // pred_check_branch
          %518 = sbr.rel (%p516) target = $region36
        $region35: #{tpu_custom_call.1} parent=11 // pred_region
          _
        $region36: #{tpu_custom_call.1} parent=11 // pred_fallthru
          _
        // Predicated region
        $region37: #{tpu_custom_call.1} parent=11 // pred_check
          %p519 = pneg %p249
        $region38: #{tpu_custom_call.1} parent=11 // pred_check_branch
          %521 = sbr.rel (%p519) target = $region40
        $region39: #{tpu_custom_call.1} parent=11 // pred_region
          %s523 = ssub.s32 2048, 2048
          %524 = vsyncadd [#allocation9], %s523
          %s525 = sshll.u32 [#allocation10], 4
          %s526 = int_to_ptr.vmem [resolvable:$true] %s525
          %531 = dma.hbm_to_vmem [thread:$0]  %s8, 2048, %s526, [#allocation9], 64, 64, 4
        $region40: #{tpu_custom_call.1} parent=11 // pred_fallthru
          _
        // Predicated region
        $region41: #{tpu_custom_call.1} parent=11 // pred_check
          %p532 = pneg %p270
        $region42: #{tpu_custom_call.1} parent=11 // pred_check_branch
          %534 = sbr.rel (%p532) target = $region44
        $region43: #{tpu_custom_call.1} parent=11 // pred_region
          _
        $region44: #{tpu_custom_call.1} parent=11 // pred_fallthru
          _
        // Predicated region
        $region45: #{tpu_custom_call.1} parent=11 // pred_check
          %p535 = pneg %p291
        $region46: #{tpu_custom_call.1} parent=11 // pred_check_branch
          %537 = sbr.rel (%p535) target = $region48
        $region47: #{tpu_custom_call.1} parent=11 // pred_region
          %s539 = ssub.s32 2048, 2048
          %540 = vsyncadd [#allocation12], %s539
          %s541 = sshll.u32 [#allocation11], 4
          %s542 = int_to_ptr.vmem [resolvable:$true] %s541
          %547 = dma.hbm_to_vmem [thread:$0]  %s10, 2048, %s542, [#allocation12], 64, 64, 4
        $region48: #{tpu_custom_call.1} parent=11 // pred_fallthru
          _
        // Predicated region
        $region49: #{tpu_custom_call.1} parent=11 // pred_check
          %p548 = pneg %p312
        $region50: #{tpu_custom_call.1} parent=11 // pred_check_branch
          %550 = sbr.rel (%p548) target = $region52
        $region51: #{tpu_custom_call.1} parent=11 // pred_region
          _
        $region52: #{tpu_custom_call.1} parent=11 // pred_fallthru
          _
        // Predicated region
        $region53: #{tpu_custom_call.1} parent=11 // pred_check
          %p551 = pneg %p333
        $region54: #{tpu_custom_call.1} parent=11 // pred_check_branch
          %553 = sbr.rel (%p551) target = $region56
        $region55: #{tpu_custom_call.1} parent=11 // pred_region
          _
        $region56: #{tpu_custom_call.1} parent=11 // pred_fallthru
          _
        // Predicated region
        $region57: #{tpu_custom_call.1} parent=11 // pred_check
          %p554 = pneg %p354
        $region58: #{tpu_custom_call.1} parent=11 // pred_check_branch
          %556 = sbr.rel (%p554) target = $region60
        $region59: #{tpu_custom_call.1} parent=11 // pred_region
          _
        $region60: #{tpu_custom_call.1} parent=11 // pred_fallthru
          _
        // Predicated region
        $region61: #{tpu_custom_call.1} parent=11 // pred_check
          %p557 = pneg %p375
        $region62: #{tpu_custom_call.1} parent=11 // pred_check_branch
          %559 = sbr.rel (%p557) target = $region64
        $region63: #{tpu_custom_call.1} parent=11 // pred_region
          %s561 = ssub.s32 2048, 2048
          %562 = vsyncadd [#allocation12], %s561
          %s563 = sshll.u32 [#allocation13], 4
          %s564 = int_to_ptr.vmem [resolvable:$true] %s563
          %569 = dma.hbm_to_vmem [thread:$0]  %s14, 2048, %s564, [#allocation12], 128, 128, 8
        $region64: #{tpu_custom_call.1} parent=11 // pred_fallthru
          _
        // Predicated region
        $region65: #{tpu_custom_call.1} parent=11 // pred_check
          %p570 = pneg %p396
        $region66: #{tpu_custom_call.1} parent=11 // pred_check_branch
          %572 = sbr.rel (%p570) target = $region68
        $region67: #{tpu_custom_call.1} parent=11 // pred_region
          _
        $region68: #{tpu_custom_call.1} parent=11 // pred_fallthru
          _
        // Predicated region
        $region69: #{tpu_custom_call.1} parent=11 // pred_check
          %p573 = pneg %p417
        $region70: #{tpu_custom_call.1} parent=11 // pred_check_branch
          %575 = sbr.rel (%p573) target = $region72
        $region71: #{tpu_custom_call.1} parent=11 // pred_region
          %s577 = ssub.s32 2048, 2048
          %578 = vsyncadd [#allocation15], %s577
          %s579 = sshll.u32 [#allocation14], 4
          %s580 = int_to_ptr.vmem [resolvable:$true] %s579
          %585 = dma.hbm_to_vmem [thread:$0]  %s16, 2048, %s580, [#allocation15], 64, 64, 4
        $region72: #{tpu_custom_call.1} parent=11 // pred_fallthru
          _
        // Predicated region
        $region73: #{tpu_custom_call.1} parent=11 // pred_check
          %p586 = pneg %p438
        $region74: #{tpu_custom_call.1} parent=11 // pred_check_branch
          %588 = sbr.rel (%p586) target = $region76
        $region75: #{tpu_custom_call.1} parent=11 // pred_region
          _
        $region76: #{tpu_custom_call.1} parent=11 // pred_fallthru
          _
      $region12: #{tpu_custom_call.1} parent=5 // pred_fallthru
        _
      %p589 = scmp.lt.s32.totalorder %s36, 4
      // Predicated region
      $region77: #{tpu_custom_call.1} parent=5 // pred_check
        %p590 = pneg %p589
      $region78: #{tpu_custom_call.1} parent=5 // pred_check_branch
        %592 = sbr.rel (%p590) target = $region80
      $region79: #{tpu_custom_call.1} parent=5 // pred_region
        // Predicated region
        $region81: #{tpu_custom_call.1} parent=79 // pred_check
          %p593 = pneg %p70
        $region82: #{tpu_custom_call.1} parent=79 // pred_check_branch
          %595 = sbr.rel (%p593) target = $region84
        $region83: #{tpu_custom_call.1} parent=79 // pred_region
          %s596 = sand.u32 %s60, 1
          %s597 = scalar_lea.sflag [#allocation3], %s596
          %s598 = sand.u32 %s60, 1
          %s599 = smul.addr %s598, 8
          %s600 = scalar_lea.vmem [#allocation2], %s599
          %s602 = ssub.s32 128, 128
          %603 = vsyncadd %s597, %s602
          %s604 = smul.addr %s43, 2
          %s605 = sadd.s32 %s44, %s604
          %s606 = smul.addr %s605, 128
          %s607 = scalar_lea.hbm %s0, %s606
          %s609 = sshll.u32 %s600, 4
          %s610 = int_to_ptr.vmem [resolvable:$true] %s609
          %612 = dma.hbm_to_vmem [thread:$0]  %s607, 128, %s610, %s597
        $region84: #{tpu_custom_call.1} parent=79 // pred_fallthru
          _
        // Predicated region
        $region85: #{tpu_custom_call.1} parent=79 // pred_check
          %p613 = pneg %p96
        $region86: #{tpu_custom_call.1} parent=79 // pred_check_branch
          %615 = sbr.rel (%p613) target = $region88
        $region87: #{tpu_custom_call.1} parent=79 // pred_region
          %s616 = sand.u32 %s36, 1
          %s617 = scalar_lea.sflag [#allocation6], %s616
          %s618 = sand.u32 %s86, 1
          %s619 = smul.addr %s618, 16
          %s620 = scalar_lea.vmem [#allocation5], %s619
          %s622 = ssub.s32 256, 256
          %623 = vsyncadd %s617, %s622
          %s624 = smul.addr %s43, 2
          %s625 = smul.addr %s624, 128
          %s626 = scalar_lea.hbm %s1, %s625
          %s627 = sshll.u32 %s620, 4
          %s628 = int_to_ptr.vmem [resolvable:$true] %s627
          %633 = dma.hbm_to_vmem [thread:$0]  %s626, 256, %s628, %s617, 128, 128, 8
        $region88: #{tpu_custom_call.1} parent=79 // pred_fallthru
          _
      $region80: #{tpu_custom_call.1} parent=5 // pred_fallthru
        _
      %p634 = scmp.le.s32.totalorder 1, %s36
      %p635 = scmp.lt.s32.totalorder %s36, 5
      %p636 = pnand %p634, %p635
      %p637 = pneg %p636
      // Predicated region
      $region89: #{tpu_custom_call.1} parent=5 // pred_check
        _
      $region90: #{tpu_custom_call.1} parent=5 // pred_check_branch
        %639 = sbr.rel (%p636) target = $region92
      $region91: #{tpu_custom_call.1} parent=5 // pred_region
        %s640 = ssub.s32 %s36, 1
        %s641 = sand.u32 %s63, 1
        %s642 = scalar_lea.sflag [#allocation3], %s641
        %s643 = sand.u32 %s63, 1
        %s644 = smul.addr %s643, 8
        %s645 = scalar_lea.vmem [#allocation2], %s644
        // Predicated region
        $region93: #{tpu_custom_call.1} parent=91 // pred_check
          %p646 = pneg %p76
        $region94: #{tpu_custom_call.1} parent=91 // pred_check_branch
          %648 = sbr.rel (%p646) target = $region96
        $region95: #{tpu_custom_call.1} parent=91 // pred_region
          %649 = dma.done %s642, 128
        $region96: #{tpu_custom_call.1} parent=91 // pred_fallthru
          _
        %s650 = sand.u32 %s41, 1
        %s651 = scalar_lea.sflag [#allocation6], %s650
        %s652 = sand.u32 %s89, 1
        %s653 = smul.addr %s652, 16
        %s654 = scalar_lea.vmem [#allocation5], %s653
        // Predicated region
        $region97: #{tpu_custom_call.1} parent=91 // pred_check
          %p655 = pneg %p102
        $region98: #{tpu_custom_call.1} parent=91 // pred_check_branch
          %657 = sbr.rel (%p655) target = $region100
        $region99: #{tpu_custom_call.1} parent=91 // pred_region
          %658 = dma.done %s651, 256
        $region100: #{tpu_custom_call.1} parent=91 // pred_fallthru
          _
        // Predicated region
        $region101: #{tpu_custom_call.1} parent=91 // pred_check
          %p659 = pneg %p165
        $region102: #{tpu_custom_call.1} parent=91 // pred_check_branch
          %661 = sbr.rel (%p659) target = $region104
        $region103: #{tpu_custom_call.1} parent=91 // pred_region
          %662 = dma.done [#allocation6], 2048
        $region104: #{tpu_custom_call.1} parent=91 // pred_fallthru
          _
        // Predicated region
        $region105: #{tpu_custom_call.1} parent=91 // pred_check
          %p663 = pneg %p207
        $region106: #{tpu_custom_call.1} parent=91 // pred_check_branch
          %665 = sbr.rel (%p663) target = $region108
        $region107: #{tpu_custom_call.1} parent=91 // pred_region
          %666 = dma.done [#allocation9], 2048
        $region108: #{tpu_custom_call.1} parent=91 // pred_fallthru
          _
        // Predicated region
        $region109: #{tpu_custom_call.1} parent=91 // pred_check
          %p667 = pneg %p249
        $region110: #{tpu_custom_call.1} parent=91 // pred_check_branch
          %669 = sbr.rel (%p667) target = $region112
        $region111: #{tpu_custom_call.1} parent=91 // pred_region
          %670 = dma.done [#allocation9], 2048
        $region112: #{tpu_custom_call.1} parent=91 // pred_fallthru
          _
        // Predicated region
        $region113: #{tpu_custom_call.1} parent=91 // pred_check
          %p671 = pneg %p291
        $region114: #{tpu_custom_call.1} parent=91 // pred_check_branch
          %673 = sbr.rel (%p671) target = $region116
        $region115: #{tpu_custom_call.1} parent=91 // pred_region
          %674 = dma.done [#allocation12], 2048
        $region116: #{tpu_custom_call.1} parent=91 // pred_fallthru
          _
        // Predicated region
        $region117: #{tpu_custom_call.1} parent=91 // pred_check
          %p675 = pneg %p375
        $region118: #{tpu_custom_call.1} parent=91 // pred_check_branch
          %677 = sbr.rel (%p675) target = $region120
        $region119: #{tpu_custom_call.1} parent=91 // pred_region
          %678 = dma.done [#allocation12], 2048
        $region120: #{tpu_custom_call.1} parent=91 // pred_fallthru
          _
        // Predicated region
        $region121: #{tpu_custom_call.1} parent=91 // pred_check
          %p679 = pneg %p417
        $region122: #{tpu_custom_call.1} parent=91 // pred_check_branch
          %681 = sbr.rel (%p679) target = $region124
        $region123: #{tpu_custom_call.1} parent=91 // pred_region
          %682 = dma.done [#allocation15], 2048
        $region124: #{tpu_custom_call.1} parent=91 // pred_fallthru
          _
        %s683 = sand.u32 %s63, 1
        %s684 = scalar_lea.sflag [#allocation3], %s683
        %s685 = sand.u32 %s63, 1
        %s686 = smul.addr %s685, 8
        %s687 = scalar_lea.vmem [#allocation2], %s686
        %p688 = pneg %p76
        %p689 = pneg %p73
        %s690 = sand.u32 %s41, 1
        %s691 = scalar_lea.sflag [#allocation6], %s690
        %s692 = sand.u32 %s89, 1
        %s693 = smul.addr %s692, 16
        %s694 = scalar_lea.vmem [#allocation5], %s693
        %p695 = pneg %p102
        %p696 = pneg %p99
        %p697 = pneg %p123
        %p698 = pneg %p120
        %p699 = pneg %p144
        %p700 = pneg %p141
        %p701 = pneg %p165
        %p702 = pneg %p162
        %p703 = pneg %p186
        %p704 = pneg %p183
        %p705 = pneg %p207
        %p706 = pneg %p204
        %p707 = pneg %p228
        %p708 = pneg %p225
        %p709 = pneg %p249
        %p710 = pneg %p246
        %p711 = pneg %p270
        %p712 = pneg %p267
        %p713 = pneg %p291
        %p714 = pneg %p288
        %p715 = pneg %p312
        %p716 = pneg %p309
        %p717 = pneg %p333
        %p718 = pneg %p330
        %p719 = pneg %p354
        %p720 = pneg %p351
        %p721 = pneg %p375
        %p722 = pneg %p372
        %p723 = pneg %p396
        %p724 = pneg %p393
        %p725 = pneg %p417
        %p726 = pneg %p414
        %p727 = pneg %p438
        %p728 = pneg %p435
        %p729 = pneg %p466
        %p730 = pneg %p463
        %s731 = sand.u32 %s453, 1
        %s732 = scalar_lea.sflag [#allocation4], %s731
        %s733 = sand.u32 %s453, 1
        %s734 = smul.addr %s733, 8
        %s735 = scalar_lea.vmem [#allocation16], %s734
        %v737 = vld [vmem:[%s645] sm:$0xff]
        %v738 = vld [vmem:[%s654] sm:$0xff]
        %v739 = vld [vmem:[%s654 + $0x8] sm:$0xff]
        %v740 = vld [vmem:[%s2] sm:$0x1]
        %v741 = vld [vmem:[%s3] sm:$0x1]
        %742 = vadd.xlane.f32.xlu0 %v737
        %v743 = vpop.xlane.xlu0 %742
        %v744 = vrcp.pop 128.0
        %v745 = vmul.f32 %v743, %v744
        %v746 = vsub.f32 %v737, %v745
        %v747 = vmul.f32 %v746, %v746
        %748 = vadd.xlane.f32.xlu0 %v747
        %v749 = vpop.xlane.xlu0 %748
        %v750 = vmul.f32 %v749, %v744
        %v751 = vadd.f32 %v750, 1e-05
        %v752 = vrsqrt.pop %v751
        %v753 = vmul.f32 %v746, %v752
        %v755 = vlaneseq
        %v756 = vshrl.u32 %v755, 7
        %v757 = vsub.s32 0, %v756
        %v758 = vrot.slane %v740, %v757
        %v760 = vmul.f32 %v753, %v758
        %v762 = vlaneseq
        %v763 = vshrl.u32 %v762, 7
        %v764 = vsub.s32 0, %v763
        %v765 = vrot.slane %v741, %v764
        %v767 = vadd.f32 %v760, %v765
        %768 = vadd.xlane.f32.xlu0 %v738
        %v769 = vpop.xlane.xlu0 %768
        %770 = vadd.xlane.f32.xlu0 %v739
        %v771 = vpop.xlane.xlu0 %770
        %v772 = vmul.f32 %v769, %v744
        %v773 = vmul.f32 %v771, %v744
        %v774 = vsub.f32 %v738, %v772
        %v775 = vsub.f32 %v739, %v773
        %v776 = vmul.f32 %v774, %v774
        %v777 = vmul.f32 %v775, %v775
        %778 = vadd.xlane.f32.xlu0 %v776
        %v779 = vpop.xlane.xlu0 %778
        %780 = vadd.xlane.f32.xlu0 %v777
        %v781 = vpop.xlane.xlu0 %780
        %v782 = vmul.f32 %v779, %v744
        %v783 = vmul.f32 %v781, %v744
        %v784 = vadd.f32 %v782, 1e-05
        %v785 = vadd.f32 %v783, 1e-05
        %v786 = vrsqrt.pop %v784
        %v787 = vrsqrt.pop %v785
        %v788 = vmul.f32 %v774, %v786
        %v789 = vmul.f32 %v775, %v787
        %v790 = vmul.f32 %v788, %v758
        %v791 = vmul.f32 %v789, %v758
        %v792 = vadd.f32 %v790, %v765
        %v793 = vadd.f32 %v791, %v765
        %v794 = vpack.c.bf16 %v767, %v767
        %v795 = vpack.c.bf16 %v793, %v792
        %v796 = vld [vmem:[#allocation7] sm:$0xf]
        %v797 = vld [vmem:[#allocation7 + $0x4] sm:$0xf]
        %v798 = vld [vmem:[#allocation7 + $0x8] sm:$0xf]
        %v799 = vld [vmem:[#allocation7 + $0xc] sm:$0xf]
        %v800 = vld [vmem:[#allocation7 + $0x10] sm:$0xf]
        %v801 = vld [vmem:[#allocation7 + $0x14] sm:$0xf]
        %v802 = vld [vmem:[#allocation7 + $0x18] sm:$0xf]
        %v803 = vld [vmem:[#allocation7 + $0x1c] sm:$0xf]
        %v804 = vld [vmem:[#allocation7 + $0x20] sm:$0xf]
        %v805 = vld [vmem:[#allocation7 + $0x24] sm:$0xf]
        %v806 = vld [vmem:[#allocation7 + $0x28] sm:$0xf]
        %v807 = vld [vmem:[#allocation7 + $0x2c] sm:$0xf]
        %v808 = vld [vmem:[#allocation7 + $0x30] sm:$0xf]
        %v809 = vld [vmem:[#allocation7 + $0x34] sm:$0xf]
        %v810 = vld [vmem:[#allocation7 + $0x38] sm:$0xf]
        %v811 = vld [vmem:[#allocation7 + $0x3c] sm:$0xf]
        %v812 = vld [vmem:[%s5] sm:$0x1]
        %v814 = vlaneseq
        %v815 = vshrl.u32 %v814, 7
        %v816 = vsub.s32 0, %v815
        %v817 = vrot.slane %v812, %v816
        %v835 = vunpack.c.l.b16 %v796
        %v836 = vunpack.c.l.b16 %v797
        %v837 = vunpack.c.l.b16 %v798
        %v838 = vunpack.c.l.b16 %v799
        %v839 = vunpack.c.l.b16 %v800
        %v840 = vunpack.c.l.b16 %v801
        %v841 = vunpack.c.l.b16 %v802
        %v842 = vunpack.c.l.b16 %v803
        %v843 = vunpack.c.l.b16 %v804
        %v844 = vunpack.c.l.b16 %v805
        %v845 = vunpack.c.l.b16 %v806
        %v846 = vunpack.c.l.b16 %v807
        %v847 = vunpack.c.l.b16 %v808
        %v848 = vunpack.c.l.b16 %v809
        %v849 = vunpack.c.l.b16 %v810
        %v850 = vunpack.c.l.b16 %v811
        %v851 = vpack.c.b16 %v836, %v835
        %v852 = vpack.c.b16 %v838, %v837
        %v853 = vpack.c.b16 %v840, %v839
        %v854 = vpack.c.b16 %v842, %v841
        %v855 = vpack.c.b16 %v844, %v843
        %v856 = vpack.c.b16 %v846, %v845
        %v857 = vpack.c.b16 %v848, %v847
        %v858 = vpack.c.b16 %v850, %v849
        %867 = vmatprep.subr.bf16.mxu0 0
        %868 = vmatpush1.bf16.msra.mxu0 %v851
        %869 = vmatprep.subr.bf16.mxu0 0
        %870 = vmatpush1.bf16.msra.mxu0 %v852
        %871 = vmatprep.subr.bf16.mxu0 0
        %872 = vmatpush1.bf16.msra.mxu0 %v853
        %873 = vmatprep.subr.bf16.mxu0 0
        %874 = vmatpush1.bf16.msra.mxu0 %v854
        %875 = vmatprep.subr.bf16.mxu0 0
        %876 = vmatpush1.bf16.msra.mxu0 %v855
        %877 = vmatprep.subr.bf16.mxu0 0
        %878 = vmatpush1.bf16.msra.mxu0 %v856
        %879 = vmatprep.subr.bf16.mxu0 0
        %880 = vmatpush1.bf16.msra.mxu0 %v857
        %881 = vmatprep.subr.bf16.mxu0 0
        %882 = vmatpush1.bf16.msra.mxu0 %v858
        %883 = vmatprep.subr.bf16.mxu0 0
        %884 = vmatpush1.bf16.msra.mxu0 0
        %885 = vmatprep.subr.bf16.mxu0 0
        %886 = vmatpush1.bf16.msra.mxu0 0
        %887 = vmatprep.subr.bf16.mxu0 0
        %888 = vmatpush1.bf16.msra.mxu0 0
        %889 = vmatprep.subr.bf16.mxu0 0
        %890 = vmatpush1.bf16.msra.mxu0 0
        %891 = vmatprep.subr.bf16.mxu0 0
        %892 = vmatpush1.bf16.msra.mxu0 0
        %893 = vmatprep.subr.bf16.mxu0 0
        %894 = vmatpush1.bf16.msra.mxu0 0
        %895 = vmatprep.subr.bf16.mxu0 0
        %896 = vmatpush1.bf16.msra.mxu0 0
        %897 = vmatprep.subr.bf16.mxu0 0
        %898 = vmatpush1.bf16.msra.mxu0 0
        %899 = vmatprep.mubr.bf16.mxu0 0
        %900 = vmatmul.mubr.bf16.gmra.mrb[0].mxu0 %v794
        %v901 = vpop.f32.mrb[0].mxu0
        %v902 = vadd.f32 %v817, %v901
        %v903 = vpop.f32.mrb[0].mxu0
        %v904 = vpop.f32.mrb[0].mxu0
        %v905 = vpop.f32.mrb[0].mxu0
        %906 = vdwg.mxu0
        %v907 = vld [vmem:[#allocation8] sm:$0xf]
        %v908 = vld [vmem:[#allocation8 + $0x4] sm:$0xf]
        %v909 = vld [vmem:[#allocation8 + $0x8] sm:$0xf]
        %v910 = vld [vmem:[#allocation8 + $0xc] sm:$0xf]
        %v911 = vld [vmem:[#allocation8 + $0x10] sm:$0xf]
        %v912 = vld [vmem:[#allocation8 + $0x14] sm:$0xf]
        %v913 = vld [vmem:[#allocation8 + $0x18] sm:$0xf]
        %v914 = vld [vmem:[#allocation8 + $0x1c] sm:$0xf]
        %v915 = vld [vmem:[#allocation8 + $0x20] sm:$0xf]
        %v916 = vld [vmem:[#allocation8 + $0x24] sm:$0xf]
        %v917 = vld [vmem:[#allocation8 + $0x28] sm:$0xf]
        %v918 = vld [vmem:[#allocation8 + $0x2c] sm:$0xf]
        %v919 = vld [vmem:[#allocation8 + $0x30] sm:$0xf]
        %v920 = vld [vmem:[#allocation8 + $0x34] sm:$0xf]
        %v921 = vld [vmem:[#allocation8 + $0x38] sm:$0xf]
        %v922 = vld [vmem:[#allocation8 + $0x3c] sm:$0xf]
        %v923 = vld [vmem:[%s7] sm:$0x1]
        %v925 = vlaneseq
        %v926 = vshrl.u32 %v925, 7
        %v927 = vsub.s32 0, %v926
        %v928 = vrot.slane %v923, %v927
        %v946 = vunpack.c.l.b16 %v907
        %v947 = vunpack.c.l.b16 %v908
        %v948 = vunpack.c.l.b16 %v909
        %v949 = vunpack.c.l.b16 %v910
        %v950 = vunpack.c.l.b16 %v911
        %v951 = vunpack.c.l.b16 %v912
        %v952 = vunpack.c.l.b16 %v913
        %v953 = vunpack.c.l.b16 %v914
        %v954 = vunpack.c.l.b16 %v915
        %v955 = vunpack.c.l.b16 %v916
        %v956 = vunpack.c.l.b16 %v917
        %v957 = vunpack.c.l.b16 %v918
        %v958 = vunpack.c.l.b16 %v919
        %v959 = vunpack.c.l.b16 %v920
        %v960 = vunpack.c.l.b16 %v921
        %v961 = vunpack.c.l.b16 %v922
        %v962 = vpack.c.b16 %v947, %v946
        %v963 = vpack.c.b16 %v949, %v948
        %v964 = vpack.c.b16 %v951, %v950
        %v965 = vpack.c.b16 %v953, %v952
        %v966 = vpack.c.b16 %v955, %v954
        %v967 = vpack.c.b16 %v957, %v956
        %v968 = vpack.c.b16 %v959, %v958
        %v969 = vpack.c.b16 %v961, %v960
        %978 = vmatprep.subr.bf16.mxu0 0
        %979 = vmatpush1.bf16.msra.mxu0 %v962
        %980 = vmatprep.subr.bf16.mxu0 0
        %981 = vmatpush1.bf16.msra.mxu0 %v963
        %982 = vmatprep.subr.bf16.mxu0 0
        %983 = vmatpush1.bf16.msra.mxu0 %v964
        %984 = vmatprep.subr.bf16.mxu0 0
        %985 = vmatpush1.bf16.msra.mxu0 %v965
        %986 = vmatprep.subr.bf16.mxu0 0
        %987 = vmatpush1.bf16.msra.mxu0 %v966
        %988 = vmatprep.subr.bf16.mxu0 0
        %989 = vmatpush1.bf16.msra.mxu0 %v967
        %990 = vmatprep.subr.bf16.mxu0 0
        %991 = vmatpush1.bf16.msra.mxu0 %v968
        %992 = vmatprep.subr.bf16.mxu0 0
        %993 = vmatpush1.bf16.msra.mxu0 %v969
        %994 = vmatprep.subr.bf16.mxu0 0
        %995 = vmatpush1.bf16.msra.mxu0 0
        %996 = vmatprep.subr.bf16.mxu0 0
        %997 = vmatpush1.bf16.msra.mxu0 0
        %998 = vmatprep.subr.bf16.mxu0 0
        %999 = vmatpush1.bf16.msra.mxu0 0
        %1000 = vmatprep.subr.bf16.mxu0 0
        %1001 = vmatpush1.bf16.msra.mxu0 0
        %1002 = vmatprep.subr.bf16.mxu0 0
        %1003 = vmatpush1.bf16.msra.mxu0 0
        %1004 = vmatprep.subr.bf16.mxu0 0
        %1005 = vmatpush1.bf16.msra.mxu0 0
        %1006 = vmatprep.subr.bf16.mxu0 0
        %1007 = vmatpush1.bf16.msra.mxu0 0
        %1008 = vmatprep.subr.bf16.mxu0 0
        %1009 = vmatpush1.bf16.msra.mxu0 0
        %1010 = vmatprep.mubr.bf16.mxu0 0
        %1011 = vmatmul.mubr.bf16.gmra.mrb[0].mxu0 %v795
        %v1012 = vpop.f32.mrb[0].mxu0
        %v1013 = vadd.f32 %v928, %v1012
        %v1014 = vpop.f32.mrb[0].mxu0
        %v1015 = vpop.f32.mrb[0].mxu0
        %v1016 = vadd.f32 %v928, %v1015
        %v1017 = vpop.f32.mrb[0].mxu0
        %1018 = vdwg.mxu0
        %v1019 = vld [vmem:[#allocation10] sm:$0xf]
        %v1020 = vld [vmem:[#allocation10 + $0x4] sm:$0xf]
        %v1021 = vld [vmem:[#allocation10 + $0x8] sm:$0xf]
        %v1022 = vld [vmem:[#allocation10 + $0xc] sm:$0xf]
        %v1023 = vld [vmem:[#allocation10 + $0x10] sm:$0xf]
        %v1024 = vld [vmem:[#allocation10 + $0x14] sm:$0xf]
        %v1025 = vld [vmem:[#allocation10 + $0x18] sm:$0xf]
        %v1026 = vld [vmem:[#allocation10 + $0x1c] sm:$0xf]
        %v1027 = vld [vmem:[#allocation10 + $0x20] sm:$0xf]
        %v1028 = vld [vmem:[#allocation10 + $0x24] sm:$0xf]
        %v1029 = vld [vmem:[#allocation10 + $0x28] sm:$0xf]
        %v1030 = vld [vmem:[#allocation10 + $0x2c] sm:$0xf]
        %v1031 = vld [vmem:[#allocation10 + $0x30] sm:$0xf]
        %v1032 = vld [vmem:[#allocation10 + $0x34] sm:$0xf]
        %v1033 = vld [vmem:[#allocation10 + $0x38] sm:$0xf]
        %v1034 = vld [vmem:[#allocation10 + $0x3c] sm:$0xf]
        %v1035 = vld [vmem:[%s9] sm:$0x1]
        %v1037 = vlaneseq
        %v1038 = vshrl.u32 %v1037, 7
        %v1039 = vsub.s32 0, %v1038
        %v1040 = vrot.slane %v1035, %v1039
        %v1058 = vunpack.c.l.b16 %v1019
        %v1059 = vunpack.c.l.b16 %v1020
        %v1060 = vunpack.c.l.b16 %v1021
        %v1061 = vunpack.c.l.b16 %v1022
        %v1062 = vunpack.c.l.b16 %v1023
        %v1063 = vunpack.c.l.b16 %v1024
        %v1064 = vunpack.c.l.b16 %v1025
        %v1065 = vunpack.c.l.b16 %v1026
        %v1066 = vunpack.c.l.b16 %v1027
        %v1067 = vunpack.c.l.b16 %v1028
        %v1068 = vunpack.c.l.b16 %v1029
        %v1069 = vunpack.c.l.b16 %v1030
        %v1070 = vunpack.c.l.b16 %v1031
        %v1071 = vunpack.c.l.b16 %v1032
        %v1072 = vunpack.c.l.b16 %v1033
        %v1073 = vunpack.c.l.b16 %v1034
        %v1074 = vpack.c.b16 %v1059, %v1058
        %v1075 = vpack.c.b16 %v1061, %v1060
        %v1076 = vpack.c.b16 %v1063, %v1062
        %v1077 = vpack.c.b16 %v1065, %v1064
        %v1078 = vpack.c.b16 %v1067, %v1066
        %v1079 = vpack.c.b16 %v1069, %v1068
        %v1080 = vpack.c.b16 %v1071, %v1070
        %v1081 = vpack.c.b16 %v1073, %v1072
        %1090 = vmatprep.subr.bf16.mxu0 0
        %1091 = vmatpush1.bf16.msra.mxu0 %v1074
        %1092 = vmatprep.subr.bf16.mxu0 0
        %1093 = vmatpush1.bf16.msra.mxu0 %v1075
        %1094 = vmatprep.subr.bf16.mxu0 0
        %1095 = vmatpush1.bf16.msra.mxu0 %v1076
        %1096 = vmatprep.subr.bf16.mxu0 0
        %1097 = vmatpush1.bf16.msra.mxu0 %v1077
        %1098 = vmatprep.subr.bf16.mxu0 0
        %1099 = vmatpush1.bf16.msra.mxu0 %v1078
        %1100 = vmatprep.subr.bf16.mxu0 0
        %1101 = vmatpush1.bf16.msra.mxu0 %v1079
        %1102 = vmatprep.subr.bf16.mxu0 0
        %1103 = vmatpush1.bf16.msra.mxu0 %v1080
        %1104 = vmatprep.subr.bf16.mxu0 0
        %1105 = vmatpush1.bf16.msra.mxu0 %v1081
        %1106 = vmatprep.subr.bf16.mxu0 0
        %1107 = vmatpush1.bf16.msra.mxu0 0
        %1108 = vmatprep.subr.bf16.mxu0 0
        %1109 = vmatpush1.bf16.msra.mxu0 0
        %1110 = vmatprep.subr.bf16.mxu0 0
        %1111 = vmatpush1.bf16.msra.mxu0 0
        %1112 = vmatprep.subr.bf16.mxu0 0
        %1113 = vmatpush1.bf16.msra.mxu0 0
        %1114 = vmatprep.subr.bf16.mxu0 0
        %1115 = vmatpush1.bf16.msra.mxu0 0
        %1116 = vmatprep.subr.bf16.mxu0 0
        %1117 = vmatpush1.bf16.msra.mxu0 0
        %1118 = vmatprep.subr.bf16.mxu0 0
        %1119 = vmatpush1.bf16.msra.mxu0 0
        %1120 = vmatprep.subr.bf16.mxu0 0
        %1121 = vmatpush1.bf16.msra.mxu0 0
        %1122 = vmatprep.mubr.bf16.mxu0 0
        %1123 = vmatmul.mubr.bf16.gmra.mrb[0].mxu0 %v795
        %v1124 = vpop.f32.mrb[0].mxu0
        %v1125 = vadd.f32 %v1040, %v1124
        %v1126 = vpop.f32.mrb[0].mxu0
        %v1127 = vpop.f32.mrb[0].mxu0
        %v1128 = vadd.f32 %v1040, %v1127
        %v1129 = vpop.f32.mrb[0].mxu0
        %1130 = vdwg.mxu0
        %v1131 = vmul.f32 %v902, 0.088388346
        %v1132 = vpack.c.bf16 %v1131, %v1131
        %v1133 = vpack.c.bf16 %v1016, %v1013
        %1134 = vmatprep.subr.bf16.mxu0 0
        %1135 = vmatpush1.bf16.xpose.msra.mxu0 %v1133
        %1136 = vmatprep.subr.bf16.mxu0 0
        %1137 = vmatpush1.bf16.xpose.msra.mxu0 0
        %1138 = vmatprep.subr.bf16.mxu0 0
        %1139 = vmatpush1.bf16.xpose.msra.mxu0 0
        %1140 = vmatprep.subr.bf16.mxu0 0
        %1141 = vmatpush1.bf16.xpose.msra.mxu0 0
        %1142 = vmatprep.subr.bf16.mxu0 0
        %1143 = vmatpush1.bf16.xpose.msra.mxu0 0
        %1144 = vmatprep.subr.bf16.mxu0 0
        %1145 = vmatpush1.bf16.xpose.msra.mxu0 0
        %1146 = vmatprep.subr.bf16.mxu0 0
        %1147 = vmatpush1.bf16.xpose.msra.mxu0 0
        %1148 = vmatprep.subr.bf16.mxu0 0
        %1149 = vmatpush1.bf16.xpose.msra.mxu0 0
        %1150 = vmatprep.subr.bf16.mxu0 0
        %1151 = vmatpush1.bf16.xpose.msra.mxu0 0
        %1152 = vmatprep.subr.bf16.mxu0 0
        %1153 = vmatpush1.bf16.xpose.msra.mxu0 0
        %1154 = vmatprep.subr.bf16.mxu0 0
        %1155 = vmatpush1.bf16.xpose.msra.mxu0 0
        %1156 = vmatprep.subr.bf16.mxu0 0
        %1157 = vmatpush1.bf16.xpose.msra.mxu0 0
        %1158 = vmatprep.subr.bf16.mxu0 0
        %1159 = vmatpush1.bf16.xpose.msra.mxu0 0
        %1160 = vmatprep.subr.bf16.mxu0 0
        %1161 = vmatpush1.bf16.xpose.msra.mxu0 0
        %1162 = vmatprep.subr.bf16.mxu0 0
        %1163 = vmatpush1.bf16.xpose.msra.mxu0 0
        %1164 = vmatprep.subr.bf16.mxu0 0
        %1165 = vmatpush1.bf16.xpose.msra.mxu0 0
        %1166 = vmatprep.mubr.bf16.mxu0 0
        %1167 = vmatmul.mubr.bf16.gmra.mrb[0].mxu0 %v1132
        %v1168 = vpop.f32.mrb[0].mxu0
        %v1169 = vadd.f32 0.0, %v1168
        %v1170 = vpop.f32.mrb[0].mxu0
        %v1171 = vpop.f32.mrb[0].mxu0
        %v1172 = vpop.f32.mrb[0].mxu0
        %1173 = vdwg.mxu0
        %v1174 = vxor.u32 %v1169, 2147483648
        %v1175 = vmul.f32 %v1174, 1.442695
        %v1176 = vpow.pop %v1175
        %v1177 = vadd.f32 %v1176, 1.0
        %v1178 = vrcp.pop %v1177
        %v1179 = vmul.f32 1.0, %v1178
        %vm1180 = vcmask 130048
        %v1181 = vsel %vm1180, %v1179, -inf
        %1182 = vmax.xlane.f32.xlu0 %v1181
        %v1183 = vpop.xlane.xlu0 %1182
        %v1184 = vsub.f32 %v1179, %v1183
        %v1185 = vmul.f32 %v1184, 1.442695
        %v1186 = vpow.pop %v1185
        %v1187 = vsel %vm1180, %v1186, 0.0
        %1188 = vadd.xlane.f32.xlu0 %v1187
        %v1189 = vpop.xlane.xlu0 %1188
        %v1190 = vrcp.pop %v1189
        %v1191 = vmul.f32 %v1186, %v1190
        %v1192 = vpack.c.bf16 %v1191, %v1191
        %v1193 = vpack.c.bf16 %v1128, %v1125
        %v1195 = vsel %vm1180, %v1192, 0
        %1197 = vmatprep.subr.bf16.mxu0 0
        %1198 = vmatpush1.bf16.msra.mxu0 %v1193
        %1199 = vmatprep.subr.bf16.mxu0 0
        %1200 = vmatpush1.bf16.msra.mxu0 0
        %1201 = vmatprep.subr.bf16.mxu0 0
        %1202 = vmatpush1.bf16.msra.mxu0 0
        %1203 = vmatprep.subr.bf16.mxu0 0
        %1204 = vmatpush1.bf16.msra.mxu0 0
        %1205 = vmatprep.subr.bf16.mxu0 0
        %1206 = vmatpush1.bf16.msra.mxu0 0
        %1207 = vmatprep.subr.bf16.mxu0 0
        %1208 = vmatpush1.bf16.msra.mxu0 0
        %1209 = vmatprep.subr.bf16.mxu0 0
        %1210 = vmatpush1.bf16.msra.mxu0 0
        %1211 = vmatprep.subr.bf16.mxu0 0
        %1212 = vmatpush1.bf16.msra.mxu0 0
        %1213 = vmatprep.subr.bf16.mxu0 0
        %1214 = vmatpush1.bf16.msra.mxu0 0
        %1215 = vmatprep.subr.bf16.mxu0 0
        %1216 = vmatpush1.bf16.msra.mxu0 0
        %1217 = vmatprep.subr.bf16.mxu0 0
        %1218 = vmatpush1.bf16.msra.mxu0 0
        %1219 = vmatprep.subr.bf16.mxu0 0
        %1220 = vmatpush1.bf16.msra.mxu0 0
        %1221 = vmatprep.subr.bf16.mxu0 0
        %1222 = vmatpush1.bf16.msra.mxu0 0
        %1223 = vmatprep.subr.bf16.mxu0 0
        %1224 = vmatpush1.bf16.msra.mxu0 0
        %1225 = vmatprep.subr.bf16.mxu0 0
        %1226 = vmatpush1.bf16.msra.mxu0 0
        %1227 = vmatprep.subr.bf16.mxu0 0
        %1228 = vmatpush1.bf16.msra.mxu0 0
        %1229 = vmatprep.mubr.bf16.mxu0 0
        %1230 = vmatmul.mubr.bf16.gmra.mrb[0].mxu0 %v1195
        %v1231 = vpop.f32.mrb[0].mxu0
        %v1232 = vadd.f32 0.0, %v1231
        %v1233 = vpop.f32.mrb[0].mxu0
        %v1234 = vpop.f32.mrb[0].mxu0
        %v1235 = vpop.f32.mrb[0].mxu0
        %1236 = vdwg.mxu0
        %v1237 = vpack.c.bf16 %v1232, %v1232
        %v1238 = vld [vmem:[#allocation11] sm:$0xf]
        %v1239 = vld [vmem:[#allocation11 + $0x4] sm:$0xf]
        %v1240 = vld [vmem:[#allocation11 + $0x8] sm:$0xf]
        %v1241 = vld [vmem:[#allocation11 + $0xc] sm:$0xf]
        %v1242 = vld [vmem:[#allocation11 + $0x10] sm:$0xf]
        %v1243 = vld [vmem:[#allocation11 + $0x14] sm:$0xf]
        %v1244 = vld [vmem:[#allocation11 + $0x18] sm:$0xf]
        %v1245 = vld [vmem:[#allocation11 + $0x1c] sm:$0xf]
        %v1246 = vld [vmem:[#allocation11 + $0x20] sm:$0xf]
        %v1247 = vld [vmem:[#allocation11 + $0x24] sm:$0xf]
        %v1248 = vld [vmem:[#allocation11 + $0x28] sm:$0xf]
        %v1249 = vld [vmem:[#allocation11 + $0x2c] sm:$0xf]
        %v1250 = vld [vmem:[#allocation11 + $0x30] sm:$0xf]
        %v1251 = vld [vmem:[#allocation11 + $0x34] sm:$0xf]
        %v1252 = vld [vmem:[#allocation11 + $0x38] sm:$0xf]
        %v1253 = vld [vmem:[#allocation11 + $0x3c] sm:$0xf]
        %s1254 = scalar_lea.vmem [#allocation7], 64
        %v1255 = vld [vmem:[%s1254] sm:$0xf]
        %v1256 = vld [vmem:[%s1254 + $0x4] sm:$0xf]
        %v1257 = vld [vmem:[%s1254 + $0x8] sm:$0xf]
        %v1258 = vld [vmem:[%s1254 + $0xc] sm:$0xf]
        %v1259 = vld [vmem:[%s1254 + $0x10] sm:$0xf]
        %v1260 = vld [vmem:[%s1254 + $0x14] sm:$0xf]
        %v1261 = vld [vmem:[%s1254 + $0x18] sm:$0xf]
        %v1262 = vld [vmem:[%s1254 + $0x1c] sm:$0xf]
        %v1263 = vld [vmem:[%s1254 + $0x20] sm:$0xf]
        %v1264 = vld [vmem:[%s1254 + $0x24] sm:$0xf]
        %v1265 = vld [vmem:[%s1254 + $0x28] sm:$0xf]
        %v1266 = vld [vmem:[%s1254 + $0x2c] sm:$0xf]
        %v1267 = vld [vmem:[%s1254 + $0x30] sm:$0xf]
        %v1268 = vld [vmem:[%s1254 + $0x34] sm:$0xf]
        %v1269 = vld [vmem:[%s1254 + $0x38] sm:$0xf]
        %v1270 = vld [vmem:[%s1254 + $0x3c] sm:$0xf]
        %s1271 = scalar_lea.vmem %s5, 1
        %v1272 = vld [vmem:[%s1271] sm:$0x1]
        %v1274 = vlaneseq
        %v1275 = vshrl.u32 %v1274, 7
        %v1276 = vsub.s32 0, %v1275
        %v1277 = vrot.slane %v1272, %v1276
        %v1295 = vunpack.c.l.b16 %v1255
        %v1296 = vunpack.c.l.b16 %v1256
        %v1297 = vunpack.c.l.b16 %v1257
        %v1298 = vunpack.c.l.b16 %v1258
        %v1299 = vunpack.c.l.b16 %v1259
        %v1300 = vunpack.c.l.b16 %v1260
        %v1301 = vunpack.c.l.b16 %v1261
        %v1302 = vunpack.c.l.b16 %v1262
        %v1303 = vunpack.c.l.b16 %v1263
        %v1304 = vunpack.c.l.b16 %v1264
        %v1305 = vunpack.c.l.b16 %v1265
        %v1306 = vunpack.c.l.b16 %v1266
        %v1307 = vunpack.c.l.b16 %v1267
        %v1308 = vunpack.c.l.b16 %v1268
        %v1309 = vunpack.c.l.b16 %v1269
        %v1310 = vunpack.c.l.b16 %v1270
        %v1311 = vpack.c.b16 %v1296, %v1295
        %v1312 = vpack.c.b16 %v1298, %v1297
        %v1313 = vpack.c.b16 %v1300, %v1299
        %v1314 = vpack.c.b16 %v1302, %v1301
        %v1315 = vpack.c.b16 %v1304, %v1303
        %v1316 = vpack.c.b16 %v1306, %v1305
        %v1317 = vpack.c.b16 %v1308, %v1307
        %v1318 = vpack.c.b16 %v1310, %v1309
        %1327 = vmatprep.subr.bf16.mxu0 0
        %1328 = vmatpush1.bf16.msra.mxu0 %v1311
        %1329 = vmatprep.subr.bf16.mxu0 0
        %1330 = vmatpush1.bf16.msra.mxu0 %v1312
        %1331 = vmatprep.subr.bf16.mxu0 0
        %1332 = vmatpush1.bf16.msra.mxu0 %v1313
        %1333 = vmatprep.subr.bf16.mxu0 0
        %1334 = vmatpush1.bf16.msra.mxu0 %v1314
        %1335 = vmatprep.subr.bf16.mxu0 0
        %1336 = vmatpush1.bf16.msra.mxu0 %v1315
        %1337 = vmatprep.subr.bf16.mxu0 0
        %1338 = vmatpush1.bf16.msra.mxu0 %v1316
        %1339 = vmatprep.subr.bf16.mxu0 0
        %1340 = vmatpush1.bf16.msra.mxu0 %v1317
        %1341 = vmatprep.subr.bf16.mxu0 0
        %1342 = vmatpush1.bf16.msra.mxu0 %v1318
        %1343 = vmatprep.subr.bf16.mxu0 0
        %1344 = vmatpush1.bf16.msra.mxu0 0
        %1345 = vmatprep.subr.bf16.mxu0 0
        %1346 = vmatpush1.bf16.msra.mxu0 0
        %1347 = vmatprep.subr.bf16.mxu0 0
        %1348 = vmatpush1.bf16.msra.mxu0 0
        %1349 = vmatprep.subr.bf16.mxu0 0
        %1350 = vmatpush1.bf16.msra.mxu0 0
        %1351 = vmatprep.subr.bf16.mxu0 0
        %1352 = vmatpush1.bf16.msra.mxu0 0
        %1353 = vmatprep.subr.bf16.mxu0 0
        %1354 = vmatpush1.bf16.msra.mxu0 0
        %1355 = vmatprep.subr.bf16.mxu0 0
        %1356 = vmatpush1.bf16.msra.mxu0 0
        %1357 = vmatprep.subr.bf16.mxu0 0
        %1358 = vmatpush1.bf16.msra.mxu0 0
        %1359 = vmatprep.mubr.bf16.mxu0 0
        %1360 = vmatmul.mubr.bf16.gmra.mrb[0].mxu0 %v794
        %v1361 = vpop.f32.mrb[0].mxu0
        %v1362 = vadd.f32 %v1277, %v1361
        %v1363 = vpop.f32.mrb[0].mxu0
        %v1364 = vpop.f32.mrb[0].mxu0
        %v1365 = vpop.f32.mrb[0].mxu0
        %1366 = vdwg.mxu0
        %s1367 = scalar_lea.vmem [#allocation8], 64
        %v1368 = vld [vmem:[%s1367] sm:$0xf]
        %v1369 = vld [vmem:[%s1367 + $0x4] sm:$0xf]
        %v1370 = vld [vmem:[%s1367 + $0x8] sm:$0xf]
        %v1371 = vld [vmem:[%s1367 + $0xc] sm:$0xf]
        %v1372 = vld [vmem:[%s1367 + $0x10] sm:$0xf]
        %v1373 = vld [vmem:[%s1367 + $0x14] sm:$0xf]
        %v1374 = vld [vmem:[%s1367 + $0x18] sm:$0xf]
        %v1375 = vld [vmem:[%s1367 + $0x1c] sm:$0xf]
        %v1376 = vld [vmem:[%s1367 + $0x20] sm:$0xf]
        %v1377 = vld [vmem:[%s1367 + $0x24] sm:$0xf]
        %v1378 = vld [vmem:[%s1367 + $0x28] sm:$0xf]
        %v1379 = vld [vmem:[%s1367 + $0x2c] sm:$0xf]
        %v1380 = vld [vmem:[%s1367 + $0x30] sm:$0xf]
        %v1381 = vld [vmem:[%s1367 + $0x34] sm:$0xf]
        %v1382 = vld [vmem:[%s1367 + $0x38] sm:$0xf]
        %v1383 = vld [vmem:[%s1367 + $0x3c] sm:$0xf]
        %s1384 = scalar_lea.vmem %s7, 1
        %v1385 = vld [vmem:[%s1384] sm:$0x1]
        %v1387 = vlaneseq
        %v1388 = vshrl.u32 %v1387, 7
        %v1389 = vsub.s32 0, %v1388
        %v1390 = vrot.slane %v1385, %v1389
        %v1408 = vunpack.c.l.b16 %v1368
        %v1409 = vunpack.c.l.b16 %v1369
        %v1410 = vunpack.c.l.b16 %v1370
        %v1411 = vunpack.c.l.b16 %v1371
        %v1412 = vunpack.c.l.b16 %v1372
        %v1413 = vunpack.c.l.b16 %v1373
        %v1414 = vunpack.c.l.b16 %v1374
        %v1415 = vunpack.c.l.b16 %v1375
        %v1416 = vunpack.c.l.b16 %v1376
        %v1417 = vunpack.c.l.b16 %v1377
        %v1418 = vunpack.c.l.b16 %v1378
        %v1419 = vunpack.c.l.b16 %v1379
        %v1420 = vunpack.c.l.b16 %v1380
        %v1421 = vunpack.c.l.b16 %v1381
        %v1422 = vunpack.c.l.b16 %v1382
        %v1423 = vunpack.c.l.b16 %v1383
        %v1424 = vpack.c.b16 %v1409, %v1408
        %v1425 = vpack.c.b16 %v1411, %v1410
        %v1426 = vpack.c.b16 %v1413, %v1412
        %v1427 = vpack.c.b16 %v1415, %v1414
        %v1428 = vpack.c.b16 %v1417, %v1416
        %v1429 = vpack.c.b16 %v1419, %v1418
        %v1430 = vpack.c.b16 %v1421, %v1420
        %v1431 = vpack.c.b16 %v1423, %v1422
        %1440 = vmatprep.subr.bf16.mxu0 0
        %1441 = vmatpush1.bf16.msra.mxu0 %v1424
        %1442 = vmatprep.subr.bf16.mxu0 0
        %1443 = vmatpush1.bf16.msra.mxu0 %v1425
        %1444 = vmatprep.subr.bf16.mxu0 0
        %1445 = vmatpush1.bf16.msra.mxu0 %v1426
        %1446 = vmatprep.subr.bf16.mxu0 0
        %1447 = vmatpush1.bf16.msra.mxu0 %v1427
        %1448 = vmatprep.subr.bf16.mxu0 0
        %1449 = vmatpush1.bf16.msra.mxu0 %v1428
        %1450 = vmatprep.subr.bf16.mxu0 0
        %1451 = vmatpush1.bf16.msra.mxu0 %v1429
        %1452 = vmatprep.subr.bf16.mxu0 0
        %1453 = vmatpush1.bf16.msra.mxu0 %v1430
        %1454 = vmatprep.subr.bf16.mxu0 0
        %1455 = vmatpush1.bf16.msra.mxu0 %v1431
        %1456 = vmatprep.subr.bf16.mxu0 0
        %1457 = vmatpush1.bf16.msra.mxu0 0
        %1458 = vmatprep.subr.bf16.mxu0 0
        %1459 = vmatpush1.bf16.msra.mxu0 0
        %1460 = vmatprep.subr.bf16.mxu0 0
        %1461 = vmatpush1.bf16.msra.mxu0 0
        %1462 = vmatprep.subr.bf16.mxu0 0
        %1463 = vmatpush1.bf16.msra.mxu0 0
        %1464 = vmatprep.subr.bf16.mxu0 0
        %1465 = vmatpush1.bf16.msra.mxu0 0
        %1466 = vmatprep.subr.bf16.mxu0 0
        %1467 = vmatpush1.bf16.msra.mxu0 0
        %1468 = vmatprep.subr.bf16.mxu0 0
        %1469 = vmatpush1.bf16.msra.mxu0 0
        %1470 = vmatprep.subr.bf16.mxu0 0
        %1471 = vmatpush1.bf16.msra.mxu0 0
        %1472 = vmatprep.mubr.bf16.mxu0 0
        %1473 = vmatmul.mubr.bf16.gmra.mrb[0].mxu0 %v795
        %v1474 = vpop.f32.mrb[0].mxu0
        %v1475 = vadd.f32 %v1390, %v1474
        %v1476 = vpop.f32.mrb[0].mxu0
        %v1477 = vpop.f32.mrb[0].mxu0
        %v1478 = vadd.f32 %v1390, %v1477
        %v1479 = vpop.f32.mrb[0].mxu0
        %1480 = vdwg.mxu0
        %s1481 = scalar_lea.vmem [#allocation10], 64
        %v1482 = vld [vmem:[%s1481] sm:$0xf]
        %v1483 = vld [vmem:[%s1481 + $0x4] sm:$0xf]
        %v1484 = vld [vmem:[%s1481 + $0x8] sm:$0xf]
        %v1485 = vld [vmem:[%s1481 + $0xc] sm:$0xf]
        %v1486 = vld [vmem:[%s1481 + $0x10] sm:$0xf]
        %v1487 = vld [vmem:[%s1481 + $0x14] sm:$0xf]
        %v1488 = vld [vmem:[%s1481 + $0x18] sm:$0xf]
        %v1489 = vld [vmem:[%s1481 + $0x1c] sm:$0xf]
        %v1490 = vld [vmem:[%s1481 + $0x20] sm:$0xf]
        %v1491 = vld [vmem:[%s1481 + $0x24] sm:$0xf]
        %v1492 = vld [vmem:[%s1481 + $0x28] sm:$0xf]
        %v1493 = vld [vmem:[%s1481 + $0x2c] sm:$0xf]
        %v1494 = vld [vmem:[%s1481 + $0x30] sm:$0xf]
        %v1495 = vld [vmem:[%s1481 + $0x34] sm:$0xf]
        %v1496 = vld [vmem:[%s1481 + $0x38] sm:$0xf]
        %v1497 = vld [vmem:[%s1481 + $0x3c] sm:$0xf]
        %s1498 = scalar_lea.vmem %s9, 1
        %v1499 = vld [vmem:[%s1498] sm:$0x1]
        %v1501 = vlaneseq
        %v1502 = vshrl.u32 %v1501, 7
        %v1503 = vsub.s32 0, %v1502
        %v1504 = vrot.slane %v1499, %v1503
        %v1522 = vunpack.c.l.b16 %v1482
        %v1523 = vunpack.c.l.b16 %v1483
        %v1524 = vunpack.c.l.b16 %v1484
        %v1525 = vunpack.c.l.b16 %v1485
        %v1526 = vunpack.c.l.b16 %v1486
        %v1527 = vunpack.c.l.b16 %v1487
        %v1528 = vunpack.c.l.b16 %v1488
        %v1529 = vunpack.c.l.b16 %v1489
        %v1530 = vunpack.c.l.b16 %v1490
        %v1531 = vunpack.c.l.b16 %v1491
        %v1532 = vunpack.c.l.b16 %v1492
        %v1533 = vunpack.c.l.b16 %v1493
        %v1534 = vunpack.c.l.b16 %v1494
        %v1535 = vunpack.c.l.b16 %v1495
        %v1536 = vunpack.c.l.b16 %v1496
        %v1537 = vunpack.c.l.b16 %v1497
        %v1538 = vpack.c.b16 %v1523, %v1522
        %v1539 = vpack.c.b16 %v1525, %v1524
        %v1540 = vpack.c.b16 %v1527, %v1526
        %v1541 = vpack.c.b16 %v1529, %v1528
        %v1542 = vpack.c.b16 %v1531, %v1530
        %v1543 = vpack.c.b16 %v1533, %v1532
        %v1544 = vpack.c.b16 %v1535, %v1534
        %v1545 = vpack.c.b16 %v1537, %v1536
        %1554 = vmatprep.subr.bf16.mxu0 0
        %1555 = vmatpush1.bf16.msra.mxu0 %v1538
        %1556 = vmatprep.subr.bf16.mxu0 0
        %1557 = vmatpush1.bf16.msra.mxu0 %v1539
        %1558 = vmatprep.subr.bf16.mxu0 0
        %1559 = vmatpush1.bf16.msra.mxu0 %v1540
        %1560 = vmatprep.subr.bf16.mxu0 0
        %1561 = vmatpush1.bf16.msra.mxu0 %v1541
        %1562 = vmatprep.subr.bf16.mxu0 0
        %1563 = vmatpush1.bf16.msra.mxu0 %v1542
        %1564 = vmatprep.subr.bf16.mxu0 0
        %1565 = vmatpush1.bf16.msra.mxu0 %v1543
        %1566 = vmatprep.subr.bf16.mxu0 0
        %1567 = vmatpush1.bf16.msra.mxu0 %v1544
        %1568 = vmatprep.subr.bf16.mxu0 0
        %1569 = vmatpush1.bf16.msra.mxu0 %v1545
        %1570 = vmatprep.subr.bf16.mxu0 0
        %1571 = vmatpush1.bf16.msra.mxu0 0
        %1572 = vmatprep.subr.bf16.mxu0 0
        %1573 = vmatpush1.bf16.msra.mxu0 0
        %1574 = vmatprep.subr.bf16.mxu0 0
        %1575 = vmatpush1.bf16.msra.mxu0 0
        %1576 = vmatprep.subr.bf16.mxu0 0
        %1577 = vmatpush1.bf16.msra.mxu0 0
        %1578 = vmatprep.subr.bf16.mxu0 0
        %1579 = vmatpush1.bf16.msra.mxu0 0
        %1580 = vmatprep.subr.bf16.mxu0 0
        %1581 = vmatpush1.bf16.msra.mxu0 0
        %1582 = vmatprep.subr.bf16.mxu0 0
        %1583 = vmatpush1.bf16.msra.mxu0 0
        %1584 = vmatprep.subr.bf16.mxu0 0
        %1585 = vmatpush1.bf16.msra.mxu0 0
        %1586 = vmatprep.mubr.bf16.mxu0 0
        %1587 = vmatmul.mubr.bf16.gmra.mrb[0].mxu0 %v795
        %v1588 = vpop.f32.mrb[0].mxu0
        %v1589 = vadd.f32 %v1504, %v1588
        %v1590 = vpop.f32.mrb[0].mxu0
        %v1591 = vpop.f32.mrb[0].mxu0
        %v1592 = vadd.f32 %v1504, %v1591
        %v1593 = vpop.f32.mrb[0].mxu0
        %1594 = vdwg.mxu0
        %v1595 = vmul.f32 %v1362, 0.088388346
        %v1596 = vpack.c.bf16 %v1595, %v1595
        %v1597 = vpack.c.bf16 %v1478, %v1475
        %1598 = vmatprep.subr.bf16.mxu0 0
        %1599 = vmatpush1.bf16.xpose.msra.mxu0 %v1597
        %1600 = vmatprep.subr.bf16.mxu0 0
        %1601 = vmatpush1.bf16.xpose.msra.mxu0 0
        %1602 = vmatprep.subr.bf16.mxu0 0
        %1603 = vmatpush1.bf16.xpose.msra.mxu0 0
        %1604 = vmatprep.subr.bf16.mxu0 0
        %1605 = vmatpush1.bf16.xpose.msra.mxu0 0
        %1606 = vmatprep.subr.bf16.mxu0 0
        %1607 = vmatpush1.bf16.xpose.msra.mxu0 0
        %1608 = vmatprep.subr.bf16.mxu0 0
        %1609 = vmatpush1.bf16.xpose.msra.mxu0 0
        %1610 = vmatprep.subr.bf16.mxu0 0
        %1611 = vmatpush1.bf16.xpose.msra.mxu0 0
        %1612 = vmatprep.subr.bf16.mxu0 0
        %1613 = vmatpush1.bf16.xpose.msra.mxu0 0
        %1614 = vmatprep.subr.bf16.mxu0 0
        %1615 = vmatpush1.bf16.xpose.msra.mxu0 0
        %1616 = vmatprep.subr.bf16.mxu0 0
        %1617 = vmatpush1.bf16.xpose.msra.mxu0 0
        %1618 = vmatprep.subr.bf16.mxu0 0
        %1619 = vmatpush1.bf16.xpose.msra.mxu0 0
        %1620 = vmatprep.subr.bf16.mxu0 0
        %1621 = vmatpush1.bf16.xpose.msra.mxu0 0
        %1622 = vmatprep.subr.bf16.mxu0 0
        %1623 = vmatpush1.bf16.xpose.msra.mxu0 0
        %1624 = vmatprep.subr.bf16.mxu0 0
        %1625 = vmatpush1.bf16.xpose.msra.mxu0 0
        %1626 = vmatprep.subr.bf16.mxu0 0
        %1627 = vmatpush1.bf16.xpose.msra.mxu0 0
        %1628 = vmatprep.subr.bf16.mxu0 0
        %1629 = vmatpush1.bf16.xpose.msra.mxu0 0
        %1630 = vmatprep.mubr.bf16.mxu0 0
        %1631 = vmatmul.mubr.bf16.gmra.mrb[0].mxu0 %v1596
        %v1632 = vpop.f32.mrb[0].mxu0
        %v1633 = vadd.f32 0.0, %v1632
        %v1634 = vpop.f32.mrb[0].mxu0
        %v1635 = vpop.f32.mrb[0].mxu0
        %v1636 = vpop.f32.mrb[0].mxu0
        %1637 = vdwg.mxu0
        %v1638 = vxor.u32 %v1633, 2147483648
        %v1639 = vmul.f32 %v1638, 1.442695
        %v1640 = vpow.pop %v1639
        %v1641 = vadd.f32 %v1640, 1.0
        %v1642 = vrcp.pop %v1641
        %v1643 = vmul.f32 1.0, %v1642
        %v1644 = vsel %vm1180, %v1643, -inf
        %1645 = vmax.xlane.f32.xlu0 %v1644
        %v1646 = vpop.xlane.xlu0 %1645
        %v1647 = vsub.f32 %v1643, %v1646
        %v1648 = vmul.f32 %v1647, 1.442695
        %v1649 = vpow.pop %v1648
        %v1650 = vsel %vm1180, %v1649, 0.0
        %1651 = vadd.xlane.f32.xlu0 %v1650
        %v1652 = vpop.xlane.xlu0 %1651
        %v1653 = vrcp.pop %v1652
        %v1654 = vmul.f32 %v1649, %v1653
        %v1655 = vpack.c.bf16 %v1654, %v1654
        %v1656 = vpack.c.bf16 %v1592, %v1589
        %v1658 = vsel %vm1180, %v1655, 0
        %1660 = vmatprep.subr.bf16.mxu0 0
        %1661 = vmatpush1.bf16.msra.mxu0 %v1656
        %1662 = vmatprep.subr.bf16.mxu0 0
        %1663 = vmatpush1.bf16.msra.mxu0 0
        %1664 = vmatprep.subr.bf16.mxu0 0
        %1665 = vmatpush1.bf16.msra.mxu0 0
        %1666 = vmatprep.subr.bf16.mxu0 0
        %1667 = vmatpush1.bf16.msra.mxu0 0
        %1668 = vmatprep.subr.bf16.mxu0 0
        %1669 = vmatpush1.bf16.msra.mxu0 0
        %1670 = vmatprep.subr.bf16.mxu0 0
        %1671 = vmatpush1.bf16.msra.mxu0 0
        %1672 = vmatprep.subr.bf16.mxu0 0
        %1673 = vmatpush1.bf16.msra.mxu0 0
        %1674 = vmatprep.subr.bf16.mxu0 0
        %1675 = vmatpush1.bf16.msra.mxu0 0
        %1676 = vmatprep.subr.bf16.mxu0 0
        %1677 = vmatpush1.bf16.msra.mxu0 0
        %1678 = vmatprep.subr.bf16.mxu0 0
        %1679 = vmatpush1.bf16.msra.mxu0 0
        %1680 = vmatprep.subr.bf16.mxu0 0
        %1681 = vmatpush1.bf16.msra.mxu0 0
        %1682 = vmatprep.subr.bf16.mxu0 0
        %1683 = vmatpush1.bf16.msra.mxu0 0
        %1684 = vmatprep.subr.bf16.mxu0 0
        %1685 = vmatpush1.bf16.msra.mxu0 0
        %1686 = vmatprep.subr.bf16.mxu0 0
        %1687 = vmatpush1.bf16.msra.mxu0 0
        %1688 = vmatprep.subr.bf16.mxu0 0
        %1689 = vmatpush1.bf16.msra.mxu0 0
        %1690 = vmatprep.subr.bf16.mxu0 0
        %1691 = vmatpush1.bf16.msra.mxu0 0
        %1692 = vmatprep.mubr.bf16.mxu0 0
        %1693 = vmatmul.mubr.bf16.gmra.mrb[0].mxu0 %v1658
        %v1694 = vpop.f32.mrb[0].mxu0
        %v1695 = vadd.f32 0.0, %v1694
        %v1696 = vpop.f32.mrb[0].mxu0
        %v1697 = vpop.f32.mrb[0].mxu0
        %v1698 = vpop.f32.mrb[0].mxu0
        %1699 = vdwg.mxu0
        %v1700 = vpack.c.bf16 %v1695, %v1695
        %s1701 = scalar_lea.vmem [#allocation11], 64
        %v1702 = vld [vmem:[%s1701] sm:$0xf]
        %v1703 = vld [vmem:[%s1701 + $0x4] sm:$0xf]
        %v1704 = vld [vmem:[%s1701 + $0x8] sm:$0xf]
        %v1705 = vld [vmem:[%s1701 + $0xc] sm:$0xf]
        %v1706 = vld [vmem:[%s1701 + $0x10] sm:$0xf]
        %v1707 = vld [vmem:[%s1701 + $0x14] sm:$0xf]
        %v1708 = vld [vmem:[%s1701 + $0x18] sm:$0xf]
        %v1709 = vld [vmem:[%s1701 + $0x1c] sm:$0xf]
        %v1710 = vld [vmem:[%s1701 + $0x20] sm:$0xf]
        %v1711 = vld [vmem:[%s1701 + $0x24] sm:$0xf]
        %v1712 = vld [vmem:[%s1701 + $0x28] sm:$0xf]
        %v1713 = vld [vmem:[%s1701 + $0x2c] sm:$0xf]
        %v1714 = vld [vmem:[%s1701 + $0x30] sm:$0xf]
        %v1715 = vld [vmem:[%s1701 + $0x34] sm:$0xf]
        %v1716 = vld [vmem:[%s1701 + $0x38] sm:$0xf]
        %v1717 = vld [vmem:[%s1701 + $0x3c] sm:$0xf]
        %v1734 = vunpack.c.l.b16 %v1702
        %v1735 = vunpack.c.l.b16 %v1703
        %v1736 = vunpack.c.l.b16 %v1704
        %v1737 = vunpack.c.l.b16 %v1705
        %v1738 = vunpack.c.l.b16 %v1706
        %v1739 = vunpack.c.l.b16 %v1707
        %v1740 = vunpack.c.l.b16 %v1708
        %v1741 = vunpack.c.l.b16 %v1709
        %v1742 = vunpack.c.l.b16 %v1710
        %v1743 = vunpack.c.l.b16 %v1711
        %v1744 = vunpack.c.l.b16 %v1712
        %v1745 = vunpack.c.l.b16 %v1713
        %v1746 = vunpack.c.l.b16 %v1714
        %v1747 = vunpack.c.l.b16 %v1715
        %v1748 = vunpack.c.l.b16 %v1716
        %v1749 = vunpack.c.l.b16 %v1717
        %v1750 = vpack.c.b16 %v1735, %v1734
        %v1751 = vpack.c.b16 %v1737, %v1736
        %v1752 = vpack.c.b16 %v1739, %v1738
        %v1753 = vpack.c.b16 %v1741, %v1740
        %v1754 = vpack.c.b16 %v1743, %v1742
        %v1755 = vpack.c.b16 %v1745, %v1744
        %v1756 = vpack.c.b16 %v1747, %v1746
        %v1757 = vpack.c.b16 %v1749, %v1748
        %1766 = vmatprep.subr.bf16.mxu0 0
        %1767 = vmatpush1.bf16.msra.mxu0 %v1750
        %1768 = vmatprep.subr.bf16.mxu0 0
        %1769 = vmatpush1.bf16.msra.mxu0 %v1751
        %1770 = vmatprep.subr.bf16.mxu0 0
        %1771 = vmatpush1.bf16.msra.mxu0 %v1752
        %1772 = vmatprep.subr.bf16.mxu0 0
        %1773 = vmatpush1.bf16.msra.mxu0 %v1753
        %1774 = vmatprep.subr.bf16.mxu0 0
        %1775 = vmatpush1.bf16.msra.mxu0 %v1754
        %1776 = vmatprep.subr.bf16.mxu0 0
        %1777 = vmatpush1.bf16.msra.mxu0 %v1755
        %1778 = vmatprep.subr.bf16.mxu0 0
        %1779 = vmatpush1.bf16.msra.mxu0 %v1756
        %1780 = vmatprep.subr.bf16.mxu0 0
        %1781 = vmatpush1.bf16.msra.mxu0 %v1757
        %1782 = vmatprep.subr.bf16.mxu0 0
        %1783 = vmatpush1.bf16.msra.mxu0 0
        %1784 = vmatprep.subr.bf16.mxu0 0
        %1785 = vmatpush1.bf16.msra.mxu0 0
        %1786 = vmatprep.subr.bf16.mxu0 0
        %1787 = vmatpush1.bf16.msra.mxu0 0
        %1788 = vmatprep.subr.bf16.mxu0 0
        %1789 = vmatpush1.bf16.msra.mxu0 0
        %1790 = vmatprep.subr.bf16.mxu0 0
        %1791 = vmatpush1.bf16.msra.mxu0 0
        %1792 = vmatprep.subr.bf16.mxu0 0
        %1793 = vmatpush1.bf16.msra.mxu0 0
        %1794 = vmatprep.subr.bf16.mxu0 0
        %1795 = vmatpush1.bf16.msra.mxu0 0
        %1796 = vmatprep.subr.bf16.mxu0 0
        %1797 = vmatpush1.bf16.msra.mxu0 0
        %1798 = vmatprep.mubr.bf16.mxu0 0
        %1799 = vmatmul.mubr.bf16.gmra.mrb[0].mxu0 %v1700
        %v1800 = vpop.f32.mrb[0].mxu0
        %v1801 = vadd.f32 0.0, %v1800
        %v1802 = vpop.f32.mrb[0].mxu0
        %v1803 = vpop.f32.mrb[0].mxu0
        %v1804 = vpop.f32.mrb[0].mxu0
        %1805 = vdwg.mxu0
        %v1822 = vunpack.c.l.b16 %v1238
        %v1823 = vunpack.c.l.b16 %v1239
        %v1824 = vunpack.c.l.b16 %v1240
        %v1825 = vunpack.c.l.b16 %v1241
        %v1826 = vunpack.c.l.b16 %v1242
        %v1827 = vunpack.c.l.b16 %v1243
        %v1828 = vunpack.c.l.b16 %v1244
        %v1829 = vunpack.c.l.b16 %v1245
        %v1830 = vunpack.c.l.b16 %v1246
        %v1831 = vunpack.c.l.b16 %v1247
        %v1832 = vunpack.c.l.b16 %v1248
        %v1833 = vunpack.c.l.b16 %v1249
        %v1834 = vunpack.c.l.b16 %v1250
        %v1835 = vunpack.c.l.b16 %v1251
        %v1836 = vunpack.c.l.b16 %v1252
        %v1837 = vunpack.c.l.b16 %v1253
        %v1838 = vpack.c.b16 %v1823, %v1822
        %v1839 = vpack.c.b16 %v1825, %v1824
        %v1840 = vpack.c.b16 %v1827, %v1826
        %v1841 = vpack.c.b16 %v1829, %v1828
        %v1842 = vpack.c.b16 %v1831, %v1830
        %v1843 = vpack.c.b16 %v1833, %v1832
        %v1844 = vpack.c.b16 %v1835, %v1834
        %v1845 = vpack.c.b16 %v1837, %v1836
        %1854 = vmatprep.subr.bf16.mxu0 0
        %1855 = vmatpush1.bf16.msra.mxu0 %v1838
        %1856 = vmatprep.subr.bf16.mxu0 0
        %1857 = vmatpush1.bf16.msra.mxu0 %v1839
        %1858 = vmatprep.subr.bf16.mxu0 0
        %1859 = vmatpush1.bf16.msra.mxu0 %v1840
        %1860 = vmatprep.subr.bf16.mxu0 0
        %1861 = vmatpush1.bf16.msra.mxu0 %v1841
        %1862 = vmatprep.subr.bf16.mxu0 0
        %1863 = vmatpush1.bf16.msra.mxu0 %v1842
        %1864 = vmatprep.subr.bf16.mxu0 0
        %1865 = vmatpush1.bf16.msra.mxu0 %v1843
        %1866 = vmatprep.subr.bf16.mxu0 0
        %1867 = vmatpush1.bf16.msra.mxu0 %v1844
        %1868 = vmatprep.subr.bf16.mxu0 0
        %1869 = vmatpush1.bf16.msra.mxu0 %v1845
        %1870 = vmatprep.subr.bf16.mxu0 0
        %1871 = vmatpush1.bf16.msra.mxu0 0
        %1872 = vmatprep.subr.bf16.mxu0 0
        %1873 = vmatpush1.bf16.msra.mxu0 0
        %1874 = vmatprep.subr.bf16.mxu0 0
        %1875 = vmatpush1.bf16.msra.mxu0 0
        %1876 = vmatprep.subr.bf16.mxu0 0
        %1877 = vmatpush1.bf16.msra.mxu0 0
        %1878 = vmatprep.subr.bf16.mxu0 0
        %1879 = vmatpush1.bf16.msra.mxu0 0
        %1880 = vmatprep.subr.bf16.mxu0 0
        %1881 = vmatpush1.bf16.msra.mxu0 0
        %1882 = vmatprep.subr.bf16.mxu0 0
        %1883 = vmatpush1.bf16.msra.mxu0 0
        %1884 = vmatprep.subr.bf16.mxu0 0
        %1885 = vmatpush1.bf16.msra.mxu0 0
        %1886 = vmatprep.mubr.bf16.mxu0 0
        %1887 = vmatmul.mubr.bf16.gmra.mrb[0].mxu0 %v1237
        %v1888 = vpop.f32.mrb[0].mxu0
        %v1889 = vadd.f32 %v1801, %v1888
        %v1890 = vpop.f32.mrb[0].mxu0
        %v1891 = vpop.f32.mrb[0].mxu0
        %v1892 = vpop.f32.mrb[0].mxu0
        %1893 = vdwg.mxu0
        %v1894 = vld [vmem:[%s11] sm:$0x1]
        %v1896 = vlaneseq
        %v1897 = vshrl.u32 %v1896, 7
        %v1898 = vsub.s32 0, %v1897
        %v1899 = vrot.slane %v1894, %v1898
        %v1901 = vadd.f32 %v1889, %v1899
        %v1902 = vadd.f32 %v737, %v1901
        %v1903 = vld [vmem:[%s12] sm:$0x1]
        %v1904 = vld [vmem:[%s13] sm:$0x1]
        %1905 = vadd.xlane.f32.xlu0 %v1902
        %v1906 = vpop.xlane.xlu0 %1905
        %v1907 = vmul.f32 %v1906, %v744
        %v1908 = vsub.f32 %v1902, %v1907
        %v1909 = vmul.f32 %v1908, %v1908
        %1910 = vadd.xlane.f32.xlu0 %v1909
        %v1911 = vpop.xlane.xlu0 %1910
        %v1912 = vmul.f32 %v1911, %v744
        %v1913 = vadd.f32 %v1912, 1e-05
        %v1914 = vrsqrt.pop %v1913
        %v1915 = vmul.f32 %v1908, %v1914
        %v1917 = vlaneseq
        %v1918 = vshrl.u32 %v1917, 7
        %v1919 = vsub.s32 0, %v1918
        %v1920 = vrot.slane %v1903, %v1919
        %v1922 = vmul.f32 %v1915, %v1920
        %v1924 = vlaneseq
        %v1925 = vshrl.u32 %v1924, 7
        %v1926 = vsub.s32 0, %v1925
        %v1927 = vrot.slane %v1904, %v1926
        %v1929 = vadd.f32 %v1922, %v1927
        %v1930 = vpack.c.bf16 %v1929, %v1929
        %v1931 = vld [vmem:[#allocation13] sm:$0xff]
        %v1932 = vld [vmem:[#allocation13 + $0x8] sm:$0xff]
        %v1933 = vld [vmem:[#allocation13 + $0x10] sm:$0xff]
        %v1934 = vld [vmem:[#allocation13 + $0x18] sm:$0xff]
        %v1935 = vld [vmem:[#allocation13 + $0x20] sm:$0xff]
        %v1936 = vld [vmem:[#allocation13 + $0x28] sm:$0xff]
        %v1937 = vld [vmem:[#allocation13 + $0x30] sm:$0xff]
        %v1938 = vld [vmem:[#allocation13 + $0x38] sm:$0xff]
        %v1939 = vld [vmem:[#allocation13 + $0x40] sm:$0xff]
        %v1940 = vld [vmem:[#allocation13 + $0x48] sm:$0xff]
        %v1941 = vld [vmem:[#allocation13 + $0x50] sm:$0xff]
        %v1942 = vld [vmem:[#allocation13 + $0x58] sm:$0xff]
        %v1943 = vld [vmem:[#allocation13 + $0x60] sm:$0xff]
        %v1944 = vld [vmem:[#allocation13 + $0x68] sm:$0xff]
        %v1945 = vld [vmem:[#allocation13 + $0x70] sm:$0xff]
        %v1946 = vld [vmem:[#allocation13 + $0x78] sm:$0xff]
        %v1947 = vld [vmem:[%s15] sm:$0x3]
        %v1949 = vlaneseq
        %v1950 = vshrl.u32 %v1949, 7
        %v1951 = vsub.s32 0, %v1950
        %v1952 = vrot.slane %v1947, %v1951
        %v1953 = vlaneseq
        %v1954 = vshrl.u32 %v1953, 7
        %v1955 = vsub.s32 1, %v1954
        %v1956 = vrot.slane %v1947, %v1955
        %v1975 = vunpack.c.l.b16 %v1931
        %v1976 = vunpack.c.h.b16 %v1931
        %v1977 = vunpack.c.l.b16 %v1932
        %v1978 = vunpack.c.h.b16 %v1932
        %v1979 = vunpack.c.l.b16 %v1933
        %v1980 = vunpack.c.h.b16 %v1933
        %v1981 = vunpack.c.l.b16 %v1934
        %v1982 = vunpack.c.h.b16 %v1934
        %v1983 = vunpack.c.l.b16 %v1935
        %v1984 = vunpack.c.h.b16 %v1935
        %v1985 = vunpack.c.l.b16 %v1936
        %v1986 = vunpack.c.h.b16 %v1936
        %v1987 = vunpack.c.l.b16 %v1937
        %v1988 = vunpack.c.h.b16 %v1937
        %v1989 = vunpack.c.l.b16 %v1938
        %v1990 = vunpack.c.h.b16 %v1938
        %v1991 = vunpack.c.l.b16 %v1939
        %v1992 = vunpack.c.h.b16 %v1939
        %v1993 = vunpack.c.l.b16 %v1940
        %v1994 = vunpack.c.h.b16 %v1940
        %v1995 = vunpack.c.l.b16 %v1941
        %v1996 = vunpack.c.h.b16 %v1941
        %v1997 = vunpack.c.l.b16 %v1942
        %v1998 = vunpack.c.h.b16 %v1942
        %v1999 = vunpack.c.l.b16 %v1943
        %v2000 = vunpack.c.h.b16 %v1943
        %v2001 = vunpack.c.l.b16 %v1944
        %v2002 = vunpack.c.h.b16 %v1944
        %v2003 = vunpack.c.l.b16 %v1945
        %v2004 = vunpack.c.h.b16 %v1945
        %v2005 = vunpack.c.l.b16 %v1946
        %v2006 = vunpack.c.h.b16 %v1946
        %v2007 = vpack.c.b16 %v1977, %v1975
        %v2008 = vpack.c.b16 %v1978, %v1976
        %v2009 = vpack.c.b16 %v1981, %v1979
        %v2010 = vpack.c.b16 %v1982, %v1980
        %v2011 = vpack.c.b16 %v1985, %v1983
        %v2012 = vpack.c.b16 %v1986, %v1984
        %v2013 = vpack.c.b16 %v1989, %v1987
        %v2014 = vpack.c.b16 %v1990, %v1988
        %v2015 = vpack.c.b16 %v1993, %v1991
        %v2016 = vpack.c.b16 %v1994, %v1992
        %v2017 = vpack.c.b16 %v1997, %v1995
        %v2018 = vpack.c.b16 %v1998, %v1996
        %v2019 = vpack.c.b16 %v2001, %v1999
        %v2020 = vpack.c.b16 %v2002, %v2000
        %v2021 = vpack.c.b16 %v2005, %v2003
        %v2022 = vpack.c.b16 %v2006, %v2004
        %2039 = vmatprep.subr.bf16.mxu0 %v2008
        %2040 = vmatpush1.bf16.msra.mxu0 %v2007
        %2041 = vmatprep.subr.bf16.mxu0 %v2010
        %2042 = vmatpush1.bf16.msra.mxu0 %v2009
        %2043 = vmatprep.subr.bf16.mxu0 %v2012
        %2044 = vmatpush1.bf16.msra.mxu0 %v2011
        %2045 = vmatprep.subr.bf16.mxu0 %v2014
        %2046 = vmatpush1.bf16.msra.mxu0 %v2013
        %2047 = vmatprep.subr.bf16.mxu0 %v2016
        %2048 = vmatpush1.bf16.msra.mxu0 %v2015
        %2049 = vmatprep.subr.bf16.mxu0 %v2018
        %2050 = vmatpush1.bf16.msra.mxu0 %v2017
        %2051 = vmatprep.subr.bf16.mxu0 %v2020
        %2052 = vmatpush1.bf16.msra.mxu0 %v2019
        %2053 = vmatprep.subr.bf16.mxu0 %v2022
        %2054 = vmatpush1.bf16.msra.mxu0 %v2021
        %2055 = vmatprep.subr.bf16.mxu0 0
        %2056 = vmatpush1.bf16.msra.mxu0 0
        %2057 = vmatprep.subr.bf16.mxu0 0
        %2058 = vmatpush1.bf16.msra.mxu0 0
        %2059 = vmatprep.subr.bf16.mxu0 0
        %2060 = vmatpush1.bf16.msra.mxu0 0
        %2061 = vmatprep.subr.bf16.mxu0 0
        %2062 = vmatpush1.bf16.msra.mxu0 0
        %2063 = vmatprep.subr.bf16.mxu0 0
        %2064 = vmatpush1.bf16.msra.mxu0 0
        %2065 = vmatprep.subr.bf16.mxu0 0
        %2066 = vmatpush1.bf16.msra.mxu0 0
        %2067 = vmatprep.subr.bf16.mxu0 0
        %2068 = vmatpush1.bf16.msra.mxu0 0
        %2069 = vmatprep.subr.bf16.mxu0 0
        %2070 = vmatpush1.bf16.msra.mxu0 0
        %2071 = vmatprep.mubr.bf16.mxu0 0
        %2072 = vmatmul.mubr.bf16.gmra.mrb[0].mxu0 %v1930
        %v2073 = vpop.f32.mrb[0].mxu0
        %v2074 = vadd.f32 %v1952, %v2073
        %v2075 = vpop.f32.mrb[0].mxu0
        %v2076 = vadd.f32 %v1956, %v2075
        %v2077 = vpop.f32.mrb[0].mxu0
        %v2078 = vpop.f32.mrb[0].mxu0
        %2079 = vdwg.mxu0
        %v2080 = vmul.f32 %v2074, 0.5
        %v2081 = vmul.f32 %v2076, 0.5
        %v2082 = vmul.f32 %v2074, 0.044715
        %v2083 = vmul.f32 %v2076, 0.044715
        %v2084 = vmul.f32 %v2082, %v2074
        %v2085 = vmul.f32 %v2083, %v2076
        %v2086 = vmul.f32 %v2084, %v2074
        %v2087 = vmul.f32 %v2085, %v2076
        %v2088 = vadd.f32 %v2074, %v2086
        %v2089 = vadd.f32 %v2076, %v2087
        %v2090 = vmul.f32 %v2088, 0.7978846
        %v2091 = vmul.f32 %v2089, 0.7978846
        %v2092 = vtanh.pop %v2090
        %v2093 = vtanh.pop %v2091
        %v2094 = vadd.f32 %v2092, 1.0
        %v2095 = vadd.f32 %v2093, 1.0
        %v2096 = vmul.f32 %v2080, %v2094
        %v2097 = vmul.f32 %v2081, %v2095
        %v2098 = vpack.c.bf16 %v2096, %v2096
        %v2099 = vpack.c.bf16 %v2097, %v2097
        %v2100 = vld [vmem:[#allocation14] sm:$0xf]
        %v2101 = vld [vmem:[#allocation14 + $0x4] sm:$0xf]
        %v2102 = vld [vmem:[#allocation14 + $0x8] sm:$0xf]
        %v2103 = vld [vmem:[#allocation14 + $0xc] sm:$0xf]
        %v2104 = vld [vmem:[#allocation14 + $0x10] sm:$0xf]
        %v2105 = vld [vmem:[#allocation14 + $0x14] sm:$0xf]
        %v2106 = vld [vmem:[#allocation14 + $0x18] sm:$0xf]
        %v2107 = vld [vmem:[#allocation14 + $0x1c] sm:$0xf]
        %v2108 = vld [vmem:[#allocation14 + $0x20] sm:$0xf]
        %v2109 = vld [vmem:[#allocation14 + $0x24] sm:$0xf]
        %v2110 = vld [vmem:[#allocation14 + $0x28] sm:$0xf]
        %v2111 = vld [vmem:[#allocation14 + $0x2c] sm:$0xf]
        %v2112 = vld [vmem:[#allocation14 + $0x30] sm:$0xf]
        %v2113 = vld [vmem:[#allocation14 + $0x34] sm:$0xf]
        %v2114 = vld [vmem:[#allocation14 + $0x38] sm:$0xf]
        %v2115 = vld [vmem:[#allocation14 + $0x3c] sm:$0xf]
        %v2116 = vld [vmem:[#allocation14 + $0x40] sm:$0xf]
        %v2117 = vld [vmem:[#allocation14 + $0x44] sm:$0xf]
        %v2118 = vld [vmem:[#allocation14 + $0x48] sm:$0xf]
        %v2119 = vld [vmem:[#allocation14 + $0x4c] sm:$0xf]
        %v2120 = vld [vmem:[#allocation14 + $0x50] sm:$0xf]
        %v2121 = vld [vmem:[#allocation14 + $0x54] sm:$0xf]
        %v2122 = vld [vmem:[#allocation14 + $0x58] sm:$0xf]
        %v2123 = vld [vmem:[#allocation14 + $0x5c] sm:$0xf]
        %v2124 = vld [vmem:[#allocation14 + $0x60] sm:$0xf]
        %v2125 = vld [vmem:[#allocation14 + $0x64] sm:$0xf]
        %v2126 = vld [vmem:[#allocation14 + $0x68] sm:$0xf]
        %v2127 = vld [vmem:[#allocation14 + $0x6c] sm:$0xf]
        %v2128 = vld [vmem:[#allocation14 + $0x70] sm:$0xf]
        %v2129 = vld [vmem:[#allocation14 + $0x74] sm:$0xf]
        %v2130 = vld [vmem:[#allocation14 + $0x78] sm:$0xf]
        %v2131 = vld [vmem:[#allocation14 + $0x7c] sm:$0xf]
        %v2132 = vld [vmem:[%s17] sm:$0x1]
        %v2134 = vlaneseq
        %v2135 = vshrl.u32 %v2134, 7
        %v2136 = vsub.s32 0, %v2135
        %v2137 = vrot.slane %v2132, %v2136
        %v2171 = vunpack.c.l.b16 %v2100
        %v2172 = vunpack.c.l.b16 %v2101
        %v2173 = vunpack.c.l.b16 %v2102
        %v2174 = vunpack.c.l.b16 %v2103
        %v2175 = vunpack.c.l.b16 %v2104
        %v2176 = vunpack.c.l.b16 %v2105
        %v2177 = vunpack.c.l.b16 %v2106
        %v2178 = vunpack.c.l.b16 %v2107
        %v2179 = vunpack.c.l.b16 %v2108
        %v2180 = vunpack.c.l.b16 %v2109
        %v2181 = vunpack.c.l.b16 %v2110
        %v2182 = vunpack.c.l.b16 %v2111
        %v2183 = vunpack.c.l.b16 %v2112
        %v2184 = vunpack.c.l.b16 %v2113
        %v2185 = vunpack.c.l.b16 %v2114
        %v2186 = vunpack.c.l.b16 %v2115
        %v2187 = vunpack.c.l.b16 %v2116
        %v2188 = vunpack.c.l.b16 %v2117
        %v2189 = vunpack.c.l.b16 %v2118
        %v2190 = vunpack.c.l.b16 %v2119
        %v2191 = vunpack.c.l.b16 %v2120
        %v2192 = vunpack.c.l.b16 %v2121
        %v2193 = vunpack.c.l.b16 %v2122
        %v2194 = vunpack.c.l.b16 %v2123
        %v2195 = vunpack.c.l.b16 %v2124
        %v2196 = vunpack.c.l.b16 %v2125
        %v2197 = vunpack.c.l.b16 %v2126
        %v2198 = vunpack.c.l.b16 %v2127
        %v2199 = vunpack.c.l.b16 %v2128
        %v2200 = vunpack.c.l.b16 %v2129
        %v2201 = vunpack.c.l.b16 %v2130
        %v2202 = vunpack.c.l.b16 %v2131
        %v2203 = vpack.c.b16 %v2172, %v2171
        %v2204 = vpack.c.b16 %v2174, %v2173
        %v2205 = vpack.c.b16 %v2176, %v2175
        %v2206 = vpack.c.b16 %v2178, %v2177
        %v2207 = vpack.c.b16 %v2180, %v2179
        %v2208 = vpack.c.b16 %v2182, %v2181
        %v2209 = vpack.c.b16 %v2184, %v2183
        %v2210 = vpack.c.b16 %v2186, %v2185
        %v2211 = vpack.c.b16 %v2188, %v2187
        %v2212 = vpack.c.b16 %v2190, %v2189
        %v2213 = vpack.c.b16 %v2192, %v2191
        %v2214 = vpack.c.b16 %v2194, %v2193
        %v2215 = vpack.c.b16 %v2196, %v2195
        %v2216 = vpack.c.b16 %v2198, %v2197
        %v2217 = vpack.c.b16 %v2200, %v2199
        %v2218 = vpack.c.b16 %v2202, %v2201
        %2235 = vmatprep.subr.bf16.mxu0 0
        %2236 = vmatpush1.bf16.msra.mxu0 %v2203
        %2237 = vmatprep.subr.bf16.mxu0 0
        %2238 = vmatpush1.bf16.msra.mxu0 %v2204
        %2239 = vmatprep.subr.bf16.mxu0 0
        %2240 = vmatpush1.bf16.msra.mxu0 %v2205
        %2241 = vmatprep.subr.bf16.mxu0 0
        %2242 = vmatpush1.bf16.msra.mxu0 %v2206
        %2243 = vmatprep.subr.bf16.mxu0 0
        %2244 = vmatpush1.bf16.msra.mxu0 %v2207
        %2245 = vmatprep.subr.bf16.mxu0 0
        %2246 = vmatpush1.bf16.msra.mxu0 %v2208
        %2247 = vmatprep.subr.bf16.mxu0 0
        %2248 = vmatpush1.bf16.msra.mxu0 %v2209
        %2249 = vmatprep.subr.bf16.mxu0 0
        %2250 = vmatpush1.bf16.msra.mxu0 %v2210
        %2251 = vmatprep.subr.bf16.mxu0 0
        %2252 = vmatpush1.bf16.msra.mxu0 %v2211
        %2253 = vmatprep.subr.bf16.mxu0 0
        %2254 = vmatpush1.bf16.msra.mxu0 %v2212
        %2255 = vmatprep.subr.bf16.mxu0 0
        %2256 = vmatpush1.bf16.msra.mxu0 %v2213
        %2257 = vmatprep.subr.bf16.mxu0 0
        %2258 = vmatpush1.bf16.msra.mxu0 %v2214
        %2259 = vmatprep.subr.bf16.mxu0 0
        %2260 = vmatpush1.bf16.msra.mxu0 %v2215
        %2261 = vmatprep.subr.bf16.mxu0 0
        %2262 = vmatpush1.bf16.msra.mxu0 %v2216
        %2263 = vmatprep.subr.bf16.mxu0 0
        %2264 = vmatpush1.bf16.msra.mxu0 %v2217
        %2265 = vmatprep.subr.bf16.mxu0 0
        %2266 = vmatpush1.bf16.msra.mxu0 %v2218
        %2267 = vmatprep.mubr.bf16.mxu0 %v2099
        %2268 = vmatmul.mubr.bf16.gmra.mrb[0].mxu0 %v2098
        %v2269 = vpop.f32.mrb[0].mxu0
        %v2270 = vadd.f32 %v2137, %v2269
        %v2271 = vpop.f32.mrb[0].mxu0
        %v2272 = vpop.f32.mrb[0].mxu0
        %v2273 = vpop.f32.mrb[0].mxu0
        %2274 = vdwg.mxu0
        %v2275 = vadd.f32 %v1902, %v2270
        %2276 = vst [vmem:[%s735] sm:$0xff] %v2275
        %s2277 = sand.u32 %s453, 1
        %s2278 = scalar_lea.sflag [#allocation4], %s2277
        %s2279 = sand.u32 %s453, 1
        %s2280 = smul.addr %s2279, 8
        %s2281 = scalar_lea.vmem [#allocation16], %s2280
        // Predicated region
        $region125: #{tpu_custom_call.1} parent=91 // pred_check
          %p2282 = pneg %p463
        $region126: #{tpu_custom_call.1} parent=91 // pred_check_branch
          %2284 = sbr.rel (%p2282) target = $region128
        $region127: #{tpu_custom_call.1} parent=91 // pred_region
          %s2286 = ssub.s32 128, 128
          %2287 = vsyncadd %s2278, %s2286
          %s2288 = smul.addr %s45, 2
          %s2289 = sadd.s32 %s46, %s2288
          %s2290 = smul.addr %s2289, 128
          %s2291 = scalar_lea.hbm %s18, %s2290
          %s2293 = sshll.u32 %s2281, 4
          %s2294 = int_to_ptr.vmem [resolvable:$true] %s2293
          %2296 = dma.vmem_to_hbm [thread:$0]  %s2294, 128, %s2291, %s2278
        $region128: #{tpu_custom_call.1} parent=91 // pred_fallthru
          _
      $region92: #{tpu_custom_call.1} parent=5 // pred_fallthru
        _
      %p2297 = scmp.le.s32.totalorder 2, %s36
      // Predicated region
      $region129: #{tpu_custom_call.1} parent=5 // pred_check
        %p2298 = pneg %p2297
      $region130: #{tpu_custom_call.1} parent=5 // pred_check_branch
        %2300 = sbr.rel (%p2298) target = $region132
      $region131: #{tpu_custom_call.1} parent=5 // pred_region
        %s2301 = ssub.s32 %s36, 2
        // Predicated region
        $region133: #{tpu_custom_call.1} parent=131 // pred_check
          %p2302 = pneg %p469
        $region134: #{tpu_custom_call.1} parent=131 // pred_check_branch
          %2304 = sbr.rel (%p2302) target = $region136
        $region135: #{tpu_custom_call.1} parent=131 // pred_region
          %s2305 = sand.u32 %s454, 1
          %s2306 = scalar_lea.sflag [#allocation4], %s2305
          %s2307 = sand.u32 %s454, 1
          %s2308 = smul.addr %s2307, 8
          %s2309 = scalar_lea.vmem [#allocation16], %s2308
          %2310 = dma.done %s2306, 128
        $region136: #{tpu_custom_call.1} parent=131 // pred_fallthru
          _
      $region132: #{tpu_custom_call.1} parent=5 // pred_fallthru
        _
    $region6: #{tpu_custom_call.1} parent=1 // loop_footer
      %s40 = sadd.s32 1, %s36
    $region7: #{tpu_custom_call.1} parent=1 // loop_footer_branch
      %35 = sbr.rel target = $region3
    $region8: #{tpu_custom_call.1} parent=1 // loop_exit
      _
    %2311 = vsyncpa [#allocation3], 1
    %s2312 = scalar_lea.sflag [#allocation3], 1
    %2313 = vsyncpa %s2312, 1
    %2314 = vsyncpa [#allocation6], 1
    %s2315 = scalar_lea.sflag [#allocation6], 1
    %2316 = vsyncpa %s2315, 1
    %2317 = vsyncpa [#allocation9], 1
    %2318 = vsyncpa [#allocation12], 1
    %2319 = vsyncpa [#allocation15], 1
    %2320 = vsyncpa [#allocation4], 1
    %s2321 = scalar_lea.sflag [#allocation4], 1
    %2322 = vsyncpa %s2321, 1

</llo_original>
